<compile_context>
chip_gen: v7x
topology: tpu7x:2x2x1
jax: 0.10.0
libtpu: 0.0.40
codegen_flags: <defaults>
</compile_context>

<pallas_src>
import functools

import jax
import jax.numpy as jnp
from jax import lax
from jax.experimental import pallas as pl
from jax.experimental.pallas import tpu as pltpu


def _idiv(x, n):
    """x // n for non-negative int32 x; shift when n is a power of two."""
    if n & (n - 1) == 0:
        return jnp.right_shift(x, n.bit_length() - 1)
    return x // n


def _imod(x, n):
    """x % n for non-negative int32 x; AND when n is a power of two."""
    if n & (n - 1) == 0:
        return jnp.bitwise_and(x, n - 1)
    return x % n


# ----------------------------- Fused kernel ---------------------------------
def _cbam_fused_kernel(x_ref, w1_ref, b1_ref, w2_ref, b2_ref, convw_ref,
                       c_ref, out_ref, *, D, H, W):
    Nb, C, S = x_ref.shape
    Cr = w1_ref.shape[0]
    HW = H * W

    # ---- boundary masks for the 3x3x3 "same" conv (shared by all Nb elems) --
    s_idx = lax.broadcasted_iota(jnp.int32, (2, S), 1)
    d_idx = _idiv(s_idx, HW)
    h_idx = _imod(_idiv(s_idx, W), H)
    w_idx = _imod(s_idx, W)
    m_d = {-1: d_idx >= 1, 1: d_idx <= D - 2}
    m_h = {-1: h_idx >= 1, 1: h_idx <= H - 2}
    m_w = {-1: w_idx >= 1, 1: w_idx <= W - 2}

    for b in range(Nb):                                  # static unroll, Nb small
        x = x_ref[b].astype(jnp.float32)                 # (C, S) lane-dense

        # ---- channel attention MLP (VPU mults + XLU sublane reduces, no MXU) --
        avg = jnp.mean(x, axis=1, keepdims=True)         # (C, 1) adaptive avg pool
        mx = jnp.max(x, axis=1, keepdims=True)           # (C, 1) adaptive max pool
        v = jnp.concatenate([avg, mx], axis=1)           # (C, 2) cols: [avg, max]

        h_rows = []
        for r in range(Cr):                              # layer 1, row by row
            hr = jnp.sum(w1_ref[r] * v, axis=0, keepdims=True) + b1_ref[r]
            h_rows.append(jnp.maximum(hr, 0.0))          # ReLU, (1, 2)
        o = None
        for r in range(Cr):                              # layer 2, rank-1 updates
            term = w2_ref[:, r:r + 1] * h_rows[r]        # (C,1)*(1,2) -> (C,2)
            o = term if o is None else o + term
        o = o + b2_ref[...]                              # (C, 2)
        chan_attn = jax.nn.sigmoid(o[:, 0:1] + o[:, 1:2])    # (C, 1)

        xc = x * chan_attn                               # (C, S) channel-attended

        # stacked channel-pooled maps: row 0 = mean over C, row 1 = max over C
        p = jnp.concatenate([jnp.mean(xc, axis=0, keepdims=True),
                             jnp.max(xc, axis=0, keepdims=True)], axis=0)  # (2, S)

        # stage xc in the output block -> frees its vregs during the tap loop
        out_ref[b] = xc.astype(out_ref.dtype)

        # ---- 3x3x3 conv, padding=1, no bias: hierarchical roll + mask --------
        accs = [jnp.zeros((2, S), jnp.float32) for _ in range(4)]
        slot = 0
        for kd, dd in enumerate((-1, 0, 1)):
            if dd == 0:
                bd = p
            else:
                bd = jnp.where(m_d[dd],
                               pltpu.roll(p, shift=(-dd * HW) % S, axis=1), 0.0)
            for kh, dh in enumerate((-1, 0, 1)):
                if dh == 0:
                    bdh = bd
                else:
                    bdh = jnp.where(m_h[dh],
                                    pltpu.roll(bd, shift=(-dh * W) % S, axis=1), 0.0)
                for kw, dw in enumerate((-1, 0, 1)):
                    if dw == 0:
                        tap = bdh
                    else:
                        tap = jnp.where(m_w[dw],
                                        pltpu.roll(bdh, shift=(-dw) % S, axis=1), 0.0)
                    t = kd * 9 + kh * 3 + kw
                    # (2,1) weight column broadcasts along lanes; 4 round-robin
                    # accumulators break the serial add chain.
                    accs[slot & 3] = accs[slot & 3] + convw_ref[:, t:t + 1] * tap
                    slot += 1
        tot = (accs[0] + accs[1]) + (accs[2] + accs[3])   # (2, S)
        c = jnp.sum(tot, axis=0, keepdims=True)           # (1, S) avg-ch + max-ch

        c_ref[b] = c.astype(c_ref.dtype)
        sp = jax.nn.sigmoid(c)                            # spatial attention
        out_ref[b] = (out_ref[b].astype(jnp.float32) * sp).astype(out_ref.dtype)


# ------------------------------ Wrapper -------------------------------------
def _pick_batch_block(N, cap=8):
    """Largest Nb <= cap dividing N while keeping >= 2 grid steps (v7x 2 TCs)."""
    best = 1
    for nb in range(1, min(N, cap) + 1):
        if N % nb == 0 and (N // nb >= 2 or N == 1):
            best = nb
    return best


def cbam_attention_block(x, params):
    """Returns (c, output) exactly like CBAMAttentionBlock.forward."""
    w1, b1, w2, b2, conv_w = params
    N, C, D, H, W = x.shape
    S = D * H * W
    Cr = w1.shape[0]

    Nb = _pick_batch_block(N)
    n_steps = N // Nb

    x2d = x.reshape(N, C, S)                 # contiguous reshape: free
    w1_3d = w1.reshape(Cr, C, 1)             # C lands on sublanes inside the kernel
    b2_c = b2.reshape(C, 1)
    convw2 = conv_w.reshape(2, 27)           # rows: (avg, max); cols: kd*9+kh*3+kw

    # VMEM budget: double-buffered x/out/c blocks + headroom (v7x: 64 MiB phys.).
    slab_bytes = 4 * Nb * S * (2 * C + 1)
    vmem_limit = int(min(32 * 1024 * 1024, max(16 * 1024 * 1024, 4 * slab_bytes)))

    kernel = functools.partial(_cbam_fused_kernel, D=D, H=H, W=W)
    c2d, out2d = pl.pallas_call(
        kernel,
        out_shape=(jax.ShapeDtypeStruct((N, 1, S), jnp.float32),
                   jax.ShapeDtypeStruct((N, C, S), x.dtype)),
        grid=(n_steps,),
        in_specs=[pl.BlockSpec((Nb, C, S), lambda n: (n, 0, 0)),
                  pl.BlockSpec((Cr, C, 1), lambda n: (0, 0, 0)),
                  pl.BlockSpec(memory_space=pltpu.MemorySpace.SMEM),   # b1 (Cr,)
                  pl.BlockSpec((C, Cr), lambda n: (0, 0)),
                  pl.BlockSpec((C, 1), lambda n: (0, 0)),
                  pl.BlockSpec((2, 27), lambda n: (0, 0))],
        out_specs=(pl.BlockSpec((Nb, 1, S), lambda n: (n, 0, 0)),
                   pl.BlockSpec((Nb, C, S), lambda n: (n, 0, 0))),
        compiler_params=pltpu.CompilerParams(
            dimension_semantics=("parallel",),
            vmem_limit_bytes=vmem_limit),
    )(x2d, w1_3d, b1, w2, b2_c, convw2)

    c = c2d.reshape(N, 1, D, H, W)
    out = out2d.reshape(N, C, D, H, W)
    return c, out


# --------------------------- Pure-JAX reference ------------------------------
def ref_forward(x, params):
    w1, b1, w2, b2, conv_w = params
    avg = jnp.mean(x, axis=(2, 3, 4), keepdims=True)   # (N,C,1,1,1)
    mx = jnp.max(x, axis=(2, 3, 4), keepdims=True)

    def mlp(v):
        vv = v[..., 0, 0, 0]                            # (N, C)
        h = jax.nn.relu(vv @ w1.T + b1[None, :])
        o = h @ w2.T + b2[None, :]
        return o[:, :, None, None, None]

    chan_attn = jax.nn.sigmoid(mlp(avg) + mlp(mx))
    xc = x * chan_attn
    ch_avg = jnp.mean(xc, axis=1, keepdims=True)
    ch_max = jnp.max(xc, axis=1, keepdims=True)
    cat = jnp.concatenate([ch_avg, ch_max], axis=1)
    c = lax.conv_general_dilated(
        cat, conv_w, window_strides=(1, 1, 1),
        padding=[(1, 1)] * 3,
        dimension_numbers=("NCDHW", "OIDHW", "NCDHW"))
    out = xc * jax.nn.sigmoid(c)
    return c, out


if __name__ == "__main__":
    N, C, D, H, W = 4, 8, 4, 8, 8          # S = D*H*W = 256 (lane-dense)
    reduction = 4
    Cr = C // reduction

    key = jax.random.PRNGKey(0)
    kx, k1, k2, k3, k4, k5 = jax.random.split(key, 6)
    x = jax.random.normal(kx, (N, C, D, H, W), dtype=jnp.float32)
    # deterministic synthetic parameters (module __init__ shapes)
    w1 = jax.random.normal(k1, (Cr, C), dtype=jnp.float32) * 0.2      # Conv3d 1x1x1 C->C/r
    b1 = jax.random.normal(k2, (Cr,), dtype=jnp.float32) * 0.1
    w2 = jax.random.normal(k3, (C, Cr), dtype=jnp.float32) * 0.2      # Conv3d 1x1x1 C/r->C
    b2 = jax.random.normal(k4, (C,), dtype=jnp.float32) * 0.1
    conv_w = jax.random.normal(k5, (1, 2, 3, 3, 3), dtype=jnp.float32) * 0.2  # Conv3d 2->1
    params = (w1, b1, w2, b2, conv_w)

    c, out = cbam_attention_block(x, params)
    c = jax.block_until_ready(c)
    out = jax.block_until_ready(out)

    c_ref, out_ref = ref_forward(x, params)
    assert c.shape == (N, 1, D, H, W) and out.shape == x.shape
    assert bool(jnp.allclose(c, c_ref, atol=1e-4, rtol=1e-4)), \
        float(jnp.max(jnp.abs(c - c_ref)))
    assert bool(jnp.allclose(out, out_ref, atol=1e-4, rtol=1e-4)), \
        float(jnp.max(jnp.abs(out - out_ref)))

    print("KERNEL_OK")
</pallas_src>

<mosaic_0001>
module attributes {stable_mosaic.version = 11 : i64} {
  func.func @_cbam_fused_kernel(%arg0: i32, %arg1: memref<2x8x256xf32, #tpu.memory_space<vmem>>, %arg2: memref<2x8x1xf32, #tpu.memory_space<vmem>>, %arg3: memref<2xf32, #tpu.memory_space<smem>>, %arg4: memref<8x2xf32, #tpu.memory_space<vmem>>, %arg5: memref<8x1xf32, #tpu.memory_space<vmem>>, %arg6: memref<2x27xf32, #tpu.memory_space<vmem>>, %arg7: memref<2x1x256xf32, #tpu.memory_space<vmem>>, %arg8: memref<2x8x256xf32, #tpu.memory_space<vmem>>) attributes {dimension_semantics = [#tpu.dimension_semantics<parallel>], iteration_bounds = array<i64: 2>, scalar_prefetch = 0 : i64, scratch_operands = 0 : i64, tpu.core_type = #tpu.core_type<tc>, window_params = [{transform_indices = @transform_0, window_bounds = array<i64: 2, 8, 256>}, {pipeline_mode = #tpu.pipeline_mode<synchronous>, transform_indices = @transform_1, window_bounds = array<i64: 2, 8, 1>}, {transform_indices = @transform_2, window_bounds = array<i64: 2>}, {pipeline_mode = #tpu.pipeline_mode<synchronous>, transform_indices = @transform_3, window_bounds = array<i64: 8, 2>}, {pipeline_mode = #tpu.pipeline_mode<synchronous>, transform_indices = @transform_4, window_bounds = array<i64: 8, 1>}, {pipeline_mode = #tpu.pipeline_mode<synchronous>, transform_indices = @transform_5, window_bounds = array<i64: 2, 27>}, {transform_indices = @transform_6, window_bounds = array<i64: 2, 1, 256>}, {transform_indices = @transform_7, window_bounds = array<i64: 2, 8, 256>}]} {
    %0 = tpu.iota {dimensions = array<i32: 1>} : vector<2x256xi32>
    %c6_i32 = arith.constant 6 : i32
    %1 = vector.broadcast %c6_i32 : i32 to vector<2x256xi32>
    %2 = arith.shrsi %0, %1 : vector<2x256xi32>
    %c3_i32 = arith.constant 3 : i32
    %3 = vector.broadcast %c3_i32 : i32 to vector<2x256xi32>
    %4 = arith.shrsi %0, %3 : vector<2x256xi32>
    %c7_i32 = arith.constant 7 : i32
    %5 = vector.broadcast %c7_i32 : i32 to vector<2x256xi32>
    %6 = arith.andi %4, %5 : vector<2x256xi32>
    %c7_i32_0 = arith.constant 7 : i32
    %7 = vector.broadcast %c7_i32_0 : i32 to vector<2x256xi32>
    %8 = arith.andi %0, %7 : vector<2x256xi32>
    %c1_i32 = arith.constant 1 : i32
    %9 = vector.broadcast %c1_i32 : i32 to vector<2x256xi32>
    %10 = arith.cmpi sge, %2, %9 : vector<2x256xi32>
    %c2_i32 = arith.constant 2 : i32
    %11 = vector.broadcast %c2_i32 : i32 to vector<2x256xi32>
    %12 = arith.cmpi sle, %2, %11 : vector<2x256xi32>
    %c1_i32_1 = arith.constant 1 : i32
    %13 = vector.broadcast %c1_i32_1 : i32 to vector<2x256xi32>
    %14 = arith.cmpi sge, %6, %13 : vector<2x256xi32>
    %c6_i32_2 = arith.constant 6 : i32
    %15 = vector.broadcast %c6_i32_2 : i32 to vector<2x256xi32>
    %16 = arith.cmpi sle, %6, %15 : vector<2x256xi32>
    %c1_i32_3 = arith.constant 1 : i32
    %17 = vector.broadcast %c1_i32_3 : i32 to vector<2x256xi32>
    %18 = arith.cmpi sge, %8, %17 : vector<2x256xi32>
    %c6_i32_4 = arith.constant 6 : i32
    %19 = vector.broadcast %c6_i32_4 : i32 to vector<2x256xi32>
    %20 = arith.cmpi sle, %8, %19 : vector<2x256xi32>
    %c0 = arith.constant 0 : index
    %c0_5 = arith.constant 0 : index
    %c0_6 = arith.constant 0 : index
    %21 = vector.load %arg1[%c0, %c0_5, %c0_6] : memref<2x8x256xf32, #tpu.memory_space<vmem>>, vector<1x8x256xf32>
    %22 = vector.shape_cast %21 : vector<1x8x256xf32> to vector<8x256xf32>
    %cst = arith.constant dense<0.000000e+00> : vector<8xf32>
    %23 = vector.multi_reduction <add>, %22, %cst [1] : vector<8x256xf32> to vector<8xf32>
    %24 = vector.shape_cast %23 : vector<8xf32> to vector<8x1xf32>
    %cst_7 = arith.constant 2.560000e+02 : f32
    %25 = vector.broadcast %cst_7 : f32 to vector<8x1xf32>
    %26 = arith.divf %24, %25 : vector<8x1xf32>
    %cst_8 = arith.constant dense<0xFF800000> : vector<8xf32>
    %27 = vector.multi_reduction <maximumf>, %22, %cst_8 [1] : vector<8x256xf32> to vector<8xf32>
    %28 = vector.shape_cast %27 : vector<8xf32> to vector<8x1xf32>
    %29 = tpu.concatenate %26, %28 in 1 : vector<8x1xf32>, vector<8x1xf32> -> vector<8x2xf32>
    %c0_9 = arith.constant 0 : index
    %c0_10 = arith.constant 0 : index
    %c0_11 = arith.constant 0 : index
    %30 = vector.load %arg2[%c0_9, %c0_10, %c0_11] : memref<2x8x1xf32, #tpu.memory_space<vmem>>, vector<1x8x1xf32>
    %31 = vector.shape_cast %30 : vector<1x8x1xf32> to vector<8x1xf32>
    %32 = vector.broadcast %31 : vector<8x1xf32> to vector<8x2xf32>
    %33 = arith.mulf %32, %29 : vector<8x2xf32>
    %cst_12 = arith.constant dense<0.000000e+00> : vector<2xf32>
    %34 = vector.multi_reduction <add>, %33, %cst_12 [0] : vector<8x2xf32> to vector<2xf32>
    %35 = vector.shape_cast %34 : vector<2xf32> to vector<1x2xf32>
    %c0_13 = arith.constant 0 : index
    %36 = memref.load %arg3[%c0_13] : memref<2xf32, #tpu.memory_space<smem>>
    %37 = vector.broadcast %36 : f32 to vector<1x2xf32>
    %38 = arith.addf %35, %37 : vector<1x2xf32>
    %cst_14 = arith.constant 0.000000e+00 : f32
    %39 = vector.broadcast %cst_14 : f32 to vector<1x2xf32>
    %40 = arith.maximumf %38, %39 : vector<1x2xf32>
    %c1 = arith.constant 1 : index
    %c0_15 = arith.constant 0 : index
    %c0_16 = arith.constant 0 : index
    %41 = vector.load %arg2[%c1, %c0_15, %c0_16] : memref<2x8x1xf32, #tpu.memory_space<vmem>>, vector<1x8x1xf32>
    %42 = vector.shape_cast %41 : vector<1x8x1xf32> to vector<8x1xf32>
    %43 = vector.broadcast %42 : vector<8x1xf32> to vector<8x2xf32>
    %44 = arith.mulf %43, %29 : vector<8x2xf32>
    %cst_17 = arith.constant dense<0.000000e+00> : vector<2xf32>
    %45 = vector.multi_reduction <add>, %44, %cst_17 [0] : vector<8x2xf32> to vector<2xf32>
    %46 = vector.shape_cast %45 : vector<2xf32> to vector<1x2xf32>
    %c1_18 = arith.constant 1 : index
    %47 = memref.load %arg3[%c1_18] : memref<2xf32, #tpu.memory_space<smem>>
    %48 = vector.broadcast %47 : f32 to vector<1x2xf32>
    %49 = arith.addf %46, %48 : vector<1x2xf32>
    %cst_19 = arith.constant 0.000000e+00 : f32
    %50 = vector.broadcast %cst_19 : f32 to vector<1x2xf32>
    %51 = arith.maximumf %49, %50 : vector<1x2xf32>
    %c0_20 = arith.constant 0 : index
    %c0_21 = arith.constant 0 : index
    %52 = vector.load %arg4[%c0_20, %c0_21] : memref<8x2xf32, #tpu.memory_space<vmem>>, vector<8x1xf32>
    %53 = vector.broadcast %52 : vector<8x1xf32> to vector<8x2xf32>
    %54 = vector.broadcast %40 : vector<1x2xf32> to vector<8x2xf32>
    %55 = arith.mulf %53, %54 : vector<8x2xf32>
    %c0_22 = arith.constant 0 : index
    %c1_23 = arith.constant 1 : index
    %56 = vector.load %arg4[%c0_22, %c1_23] : memref<8x2xf32, #tpu.memory_space<vmem>>, vector<8x1xf32>
    %57 = vector.broadcast %56 : vector<8x1xf32> to vector<8x2xf32>
    %58 = vector.broadcast %51 : vector<1x2xf32> to vector<8x2xf32>
    %59 = arith.mulf %57, %58 : vector<8x2xf32>
    %60 = arith.addf %55, %59 : vector<8x2xf32>
    %c0_24 = arith.constant 0 : index
    %c0_25 = arith.constant 0 : index
    %61 = vector.load %arg5[%c0_24, %c0_25] : memref<8x1xf32, #tpu.memory_space<vmem>>, vector<8x1xf32>
    %62 = vector.broadcast %61 : vector<8x1xf32> to vector<8x2xf32>
    %63 = arith.addf %60, %62 : vector<8x2xf32>
    %64 = vector.extract_strided_slice %63 {offsets = [0, 0], sizes = [8, 1], strides = [1, 1]} : vector<8x2xf32> to vector<8x1xf32>
    %65 = vector.extract_strided_slice %63 {offsets = [0, 1], sizes = [8, 1], strides = [1, 1]} : vector<8x2xf32> to vector<8x1xf32>
    %66 = arith.addf %64, %65 : vector<8x1xf32>
    %67 = arith.negf %66 : vector<8x1xf32>
    %68 = math.exp %67 : vector<8x1xf32>
    %cst_26 = arith.constant 1.000000e+00 : f32
    %69 = vector.broadcast %cst_26 : f32 to vector<8x1xf32>
    %70 = arith.addf %69, %68 : vector<8x1xf32>
    %71 = arith.divf %69, %70 : vector<8x1xf32>
    %72 = vector.broadcast %71 : vector<8x1xf32> to vector<8x256xf32>
    %73 = arith.mulf %22, %72 : vector<8x256xf32>
    %cst_27 = arith.constant dense<0.000000e+00> : vector<256xf32>
    %74 = vector.multi_reduction <add>, %73, %cst_27 [0] : vector<8x256xf32> to vector<256xf32>
    %75 = vector.shape_cast %74 : vector<256xf32> to vector<1x256xf32>
    %cst_28 = arith.constant 8.000000e+00 : f32
    %76 = vector.broadcast %cst_28 : f32 to vector<1x256xf32>
    %77 = arith.divf %75, %76 : vector<1x256xf32>
    %cst_29 = arith.constant dense<0xFF800000> : vector<256xf32>
    %78 = vector.multi_reduction <maximumf>, %73, %cst_29 [0] : vector<8x256xf32> to vector<256xf32>
    %79 = vector.shape_cast %78 : vector<256xf32> to vector<1x256xf32>
    %80 = tpu.concatenate %77, %79 in 0 : vector<1x256xf32>, vector<1x256xf32> -> vector<2x256xf32>
    %c0_30 = arith.constant 0 : index
    %c0_31 = arith.constant 0 : index
    %c0_32 = arith.constant 0 : index
    %81 = vector.load %arg8[%c0_30, %c0_31, %c0_32] : memref<2x8x256xf32, #tpu.memory_space<vmem>>, vector<1x8x256xf32>
    %82 = vector.shape_cast %81 : vector<1x8x256xf32> to vector<8x256xf32>
    %83 = vector.shape_cast %73 : vector<8x256xf32> to vector<1x8x256xf32>
    tpu.vector_store %arg8[%c0_30, %c0_31, %c0_32], %83 {strides = array<i32>} : memref<2x8x256xf32, #tpu.memory_space<vmem>>, vector<1x8x256xf32>,
    %cst_33 = arith.constant 0.000000e+00 : f32
    %84 = vector.broadcast %cst_33 : f32 to vector<2x256xf32>
    %cst_34 = arith.constant 0.000000e+00 : f32
    %85 = vector.broadcast %cst_34 : f32 to vector<2x256xf32>
    %cst_35 = arith.constant 0.000000e+00 : f32
    %86 = vector.broadcast %cst_35 : f32 to vector<2x256xf32>
    %cst_36 = arith.constant 0.000000e+00 : f32
    %87 = vector.broadcast %cst_36 : f32 to vector<2x256xf32>
    %c64_i32 = arith.constant 64 : i32
    %88 = tpu.dynamic_rotate %80 by %c64_i32 dim 1 : vector<2x256xf32>, i32 -> vector<2x256xf32>
    %cst_37 = arith.constant 0.000000e+00 : f32
    %89 = vector.broadcast %cst_37 : f32 to vector<2x256xf32>
    %90 = arith.select %10, %88, %89 : vector<2x256xi1>, vector<2x256xf32>
    %c8_i32 = arith.constant 8 : i32
    %91 = tpu.dynamic_rotate %90 by %c8_i32 dim 1 : vector<2x256xf32>, i32 -> vector<2x256xf32>
    %cst_38 = arith.constant 0.000000e+00 : f32
    %92 = vector.broadcast %cst_38 : f32 to vector<2x256xf32>
    %93 = arith.select %14, %91, %92 : vector<2x256xi1>, vector<2x256xf32>
    %c1_i32_39 = arith.constant 1 : i32
    %94 = tpu.dynamic_rotate %93 by %c1_i32_39 dim 1 : vector<2x256xf32>, i32 -> vector<2x256xf32>
    %cst_40 = arith.constant 0.000000e+00 : f32
    %95 = vector.broadcast %cst_40 : f32 to vector<2x256xf32>
    %96 = arith.select %18, %94, %95 : vector<2x256xi1>, vector<2x256xf32>
    %c0_41 = arith.constant 0 : index
    %c0_42 = arith.constant 0 : index
    %97 = vector.load %arg6[%c0_41, %c0_42] : memref<2x27xf32, #tpu.memory_space<vmem>>, vector<2x1xf32>
    %98 = vector.broadcast %97 : vector<2x1xf32> to vector<2x256xf32>
    %99 = arith.mulf %98, %96 : vector<2x256xf32>
    %100 = arith.addf %84, %99 : vector<2x256xf32>
    %c0_43 = arith.constant 0 : index
    %c1_44 = arith.constant 1 : index
    %101 = vector.load %arg6[%c0_43, %c1_44] : memref<2x27xf32, #tpu.memory_space<vmem>>, vector<2x1xf32>
    %102 = vector.broadcast %101 : vector<2x1xf32> to vector<2x256xf32>
    %103 = arith.mulf %102, %93 : vector<2x256xf32>
    %104 = arith.addf %85, %103 : vector<2x256xf32>
    %c255_i32 = arith.constant 255 : i32
    %105 = tpu.dynamic_rotate %93 by %c255_i32 dim 1 : vector<2x256xf32>, i32 -> vector<2x256xf32>
    %cst_45 = arith.constant 0.000000e+00 : f32
    %106 = vector.broadcast %cst_45 : f32 to vector<2x256xf32>
    %107 = arith.select %20, %105, %106 : vector<2x256xi1>, vector<2x256xf32>
    %c0_46 = arith.constant 0 : index
    %c2 = arith.constant 2 : index
    %108 = vector.load %arg6[%c0_46, %c2] : memref<2x27xf32, #tpu.memory_space<vmem>>, vector<2x1xf32>
    %109 = vector.broadcast %108 : vector<2x1xf32> to vector<2x256xf32>
    %110 = arith.mulf %109, %107 : vector<2x256xf32>
    %111 = arith.addf %86, %110 : vector<2x256xf32>
    %c1_i32_47 = arith.constant 1 : i32
    %112 = tpu.dynamic_rotate %90 by %c1_i32_47 dim 1 : vector<2x256xf32>, i32 -> vector<2x256xf32>
    %cst_48 = arith.constant 0.000000e+00 : f32
    %113 = vector.broadcast %cst_48 : f32 to vector<2x256xf32>
    %114 = arith.select %18, %112, %113 : vector<2x256xi1>, vector<2x256xf32>
    %c0_49 = arith.constant 0 : index
    %c3 = arith.constant 3 : index
    %115 = vector.load %arg6[%c0_49, %c3] : memref<2x27xf32, #tpu.memory_space<vmem>>, vector<2x1xf32>
    %116 = vector.broadcast %115 : vector<2x1xf32> to vector<2x256xf32>
    %117 = arith.mulf %116, %114 : vector<2x256xf32>
    %118 = arith.addf %87, %117 : vector<2x256xf32>
    %c0_50 = arith.constant 0 : index
    %c4 = arith.constant 4 : index
    %119 = vector.load %arg6[%c0_50, %c4] : memref<2x27xf32, #tpu.memory_space<vmem>>, vector<2x1xf32>
    %120 = vector.broadcast %119 : vector<2x1xf32> to vector<2x256xf32>
    %121 = arith.mulf %120, %90 : vector<2x256xf32>
    %122 = arith.addf %100, %121 : vector<2x256xf32>
    %c255_i32_51 = arith.constant 255 : i32
    %123 = tpu.dynamic_rotate %90 by %c255_i32_51 dim 1 : vector<2x256xf32>, i32 -> vector<2x256xf32>
    %cst_52 = arith.constant 0.000000e+00 : f32
    %124 = vector.broadcast %cst_52 : f32 to vector<2x256xf32>
    %125 = arith.select %20, %123, %124 : vector<2x256xi1>, vector<2x256xf32>
    %c0_53 = arith.constant 0 : index
    %c5 = arith.constant 5 : index
    %126 = vector.load %arg6[%c0_53, %c5] : memref<2x27xf32, #tpu.memory_space<vmem>>, vector<2x1xf32>
    %127 = vector.broadcast %126 : vector<2x1xf32> to vector<2x256xf32>
    %128 = arith.mulf %127, %125 : vector<2x256xf32>
    %129 = arith.addf %104, %128 : vector<2x256xf32>
    %c248_i32 = arith.constant 248 : i32
    %130 = tpu.dynamic_rotate %90 by %c248_i32 dim 1 : vector<2x256xf32>, i32 -> vector<2x256xf32>
    %cst_54 = arith.constant 0.000000e+00 : f32
    %131 = vector.broadcast %cst_54 : f32 to vector<2x256xf32>
    %132 = arith.select %16, %130, %131 : vector<2x256xi1>, vector<2x256xf32>
    %c1_i32_55 = arith.constant 1 : i32
    %133 = tpu.dynamic_rotate %132 by %c1_i32_55 dim 1 : vector<2x256xf32>, i32 -> vector<2x256xf32>
    %cst_56 = arith.constant 0.000000e+00 : f32
    %134 = vector.broadcast %cst_56 : f32 to vector<2x256xf32>
    %135 = arith.select %18, %133, %134 : vector<2x256xi1>, vector<2x256xf32>
    %c0_57 = arith.constant 0 : index
    %c6 = arith.constant 6 : index
    %136 = vector.load %arg6[%c0_57, %c6] : memref<2x27xf32, #tpu.memory_space<vmem>>, vector<2x1xf32>
    %137 = vector.broadcast %136 : vector<2x1xf32> to vector<2x256xf32>
    %138 = arith.mulf %137, %135 : vector<2x256xf32>
    %139 = arith.addf %111, %138 : vector<2x256xf32>
    %c0_58 = arith.constant 0 : index
    %c7 = arith.constant 7 : index
    %140 = vector.load %arg6[%c0_58, %c7] : memref<2x27xf32, #tpu.memory_space<vmem>>, vector<2x1xf32>
    %141 = vector.broadcast %140 : vector<2x1xf32> to vector<2x256xf32>
    %142 = arith.mulf %141, %132 : vector<2x256xf32>
    %143 = arith.addf %118, %142 : vector<2x256xf32>
    %c255_i32_59 = arith.constant 255 : i32
    %144 = tpu.dynamic_rotate %132 by %c255_i32_59 dim 1 : vector<2x256xf32>, i32 -> vector<2x256xf32>
    %cst_60 = arith.constant 0.000000e+00 : f32
    %145 = vector.broadcast %cst_60 : f32 to vector<2x256xf32>
    %146 = arith.select %20, %144, %145 : vector<2x256xi1>, vector<2x256xf32>
    %c0_61 = arith.constant 0 : index
    %c8 = arith.constant 8 : index
    %147 = vector.load %arg6[%c0_61, %c8] : memref<2x27xf32, #tpu.memory_space<vmem>>, vector<2x1xf32>
    %148 = vector.broadcast %147 : vector<2x1xf32> to vector<2x256xf32>
    %149 = arith.mulf %148, %146 : vector<2x256xf32>
    %150 = arith.addf %122, %149 : vector<2x256xf32>
    %c8_i32_62 = arith.constant 8 : i32
    %151 = tpu.dynamic_rotate %80 by %c8_i32_62 dim 1 : vector<2x256xf32>, i32 -> vector<2x256xf32>
    %cst_63 = arith.constant 0.000000e+00 : f32
    %152 = vector.broadcast %cst_63 : f32 to vector<2x256xf32>
    %153 = arith.select %14, %151, %152 : vector<2x256xi1>, vector<2x256xf32>
    %c1_i32_64 = arith.constant 1 : i32
    %154 = tpu.dynamic_rotate %153 by %c1_i32_64 dim 1 : vector<2x256xf32>, i32 -> vector<2x256xf32>
    %cst_65 = arith.constant 0.000000e+00 : f32
    %155 = vector.broadcast %cst_65 : f32 to vector<2x256xf32>
    %156 = arith.select %18, %154, %155 : vector<2x256xi1>, vector<2x256xf32>
    %c0_66 = arith.constant 0 : index
    %c9 = arith.constant 9 : index
    %157 = vector.load %arg6[%c0_66, %c9] : memref<2x27xf32, #tpu.memory_space<vmem>>, vector<2x1xf32>
    %158 = vector.broadcast %157 : vector<2x1xf32> to vector<2x256xf32>
    %159 = arith.mulf %158, %156 : vector<2x256xf32>
    %160 = arith.addf %129, %159 : vector<2x256xf32>
    %c0_67 = arith.constant 0 : index
    %c10 = arith.constant 10 : index
    %161 = vector.load %arg6[%c0_67, %c10] : memref<2x27xf32, #tpu.memory_space<vmem>>, vector<2x1xf32>
    %162 = vector.broadcast %161 : vector<2x1xf32> to vector<2x256xf32>
    %163 = arith.mulf %162, %153 : vector<2x256xf32>
    %164 = arith.addf %139, %163 : vector<2x256xf32>
    %c255_i32_68 = arith.constant 255 : i32
    %165 = tpu.dynamic_rotate %153 by %c255_i32_68 dim 1 : vector<2x256xf32>, i32 -> vector<2x256xf32>
    %cst_69 = arith.constant 0.000000e+00 : f32
    %166 = vector.broadcast %cst_69 : f32 to vector<2x256xf32>
    %167 = arith.select %20, %165, %166 : vector<2x256xi1>, vector<2x256xf32>
    %c0_70 = arith.constant 0 : index
    %c11 = arith.constant 11 : index
    %168 = vector.load %arg6[%c0_70, %c11] : memref<2x27xf32, #tpu.memory_space<vmem>>, vector<2x1xf32>
    %169 = vector.broadcast %168 : vector<2x1xf32> to vector<2x256xf32>
    %170 = arith.mulf %169, %167 : vector<2x256xf32>
    %171 = arith.addf %143, %170 : vector<2x256xf32>
    %c1_i32_71 = arith.constant 1 : i32
    %172 = tpu.dynamic_rotate %80 by %c1_i32_71 dim 1 : vector<2x256xf32>, i32 -> vector<2x256xf32>
    %cst_72 = arith.constant 0.000000e+00 : f32
    %173 = vector.broadcast %cst_72 : f32 to vector<2x256xf32>
    %174 = arith.select %18, %172, %173 : vector<2x256xi1>, vector<2x256xf32>
    %c0_73 = arith.constant 0 : index
    %c12 = arith.constant 12 : index
    %175 = vector.load %arg6[%c0_73, %c12] : memref<2x27xf32, #tpu.memory_space<vmem>>, vector<2x1xf32>
    %176 = vector.broadcast %175 : vector<2x1xf32> to vector<2x256xf32>
    %177 = arith.mulf %176, %174 : vector<2x256xf32>
    %178 = arith.addf %150, %177 : vector<2x256xf32>
    %c0_74 = arith.constant 0 : index
    %c13 = arith.constant 13 : index
    %179 = vector.load %arg6[%c0_74, %c13] : memref<2x27xf32, #tpu.memory_space<vmem>>, vector<2x1xf32>
    %180 = vector.broadcast %179 : vector<2x1xf32> to vector<2x256xf32>
    %181 = arith.mulf %180, %80 : vector<2x256xf32>
    %182 = arith.addf %160, %181 : vector<2x256xf32>
    %c255_i32_75 = arith.constant 255 : i32
    %183 = tpu.dynamic_rotate %80 by %c255_i32_75 dim 1 : vector<2x256xf32>, i32 -> vector<2x256xf32>
    %cst_76 = arith.constant 0.000000e+00 : f32
    %184 = vector.broadcast %cst_76 : f32 to vector<2x256xf32>
    %185 = arith.select %20, %183, %184 : vector<2x256xi1>, vector<2x256xf32>
    %c0_77 = arith.constant 0 : index
    %c14 = arith.constant 14 : index
    %186 = vector.load %arg6[%c0_77, %c14] : memref<2x27xf32, #tpu.memory_space<vmem>>, vector<2x1xf32>
    %187 = vector.broadcast %186 : vector<2x1xf32> to vector<2x256xf32>
    %188 = arith.mulf %187, %185 : vector<2x256xf32>
    %189 = arith.addf %164, %188 : vector<2x256xf32>
    %c248_i32_78 = arith.constant 248 : i32
    %190 = tpu.dynamic_rotate %80 by %c248_i32_78 dim 1 : vector<2x256xf32>, i32 -> vector<2x256xf32>
    %cst_79 = arith.constant 0.000000e+00 : f32
    %191 = vector.broadcast %cst_79 : f32 to vector<2x256xf32>
    %192 = arith.select %16, %190, %191 : vector<2x256xi1>, vector<2x256xf32>
    %c1_i32_80 = arith.constant 1 : i32
    %193 = tpu.dynamic_rotate %192 by %c1_i32_80 dim 1 : vector<2x256xf32>, i32 -> vector<2x256xf32>
    %cst_81 = arith.constant 0.000000e+00 : f32
    %194 = vector.broadcast %cst_81 : f32 to vector<2x256xf32>
    %195 = arith.select %18, %193, %194 : vector<2x256xi1>, vector<2x256xf32>
    %c0_82 = arith.constant 0 : index
    %c15 = arith.constant 15 : index
    %196 = vector.load %arg6[%c0_82, %c15] : memref<2x27xf32, #tpu.memory_space<vmem>>, vector<2x1xf32>
    %197 = vector.broadcast %196 : vector<2x1xf32> to vector<2x256xf32>
    %198 = arith.mulf %197, %195 : vector<2x256xf32>
    %199 = arith.addf %171, %198 : vector<2x256xf32>
    %c0_83 = arith.constant 0 : index
    %c16 = arith.constant 16 : index
    %200 = vector.load %arg6[%c0_83, %c16] : memref<2x27xf32, #tpu.memory_space<vmem>>, vector<2x1xf32>
    %201 = vector.broadcast %200 : vector<2x1xf32> to vector<2x256xf32>
    %202 = arith.mulf %201, %192 : vector<2x256xf32>
    %203 = arith.addf %178, %202 : vector<2x256xf32>
    %c255_i32_84 = arith.constant 255 : i32
    %204 = tpu.dynamic_rotate %192 by %c255_i32_84 dim 1 : vector<2x256xf32>, i32 -> vector<2x256xf32>
    %cst_85 = arith.constant 0.000000e+00 : f32
    %205 = vector.broadcast %cst_85 : f32 to vector<2x256xf32>
    %206 = arith.select %20, %204, %205 : vector<2x256xi1>, vector<2x256xf32>
    %c0_86 = arith.constant 0 : index
    %c17 = arith.constant 17 : index
    %207 = vector.load %arg6[%c0_86, %c17] : memref<2x27xf32, #tpu.memory_space<vmem>>, vector<2x1xf32>
    %208 = vector.broadcast %207 : vector<2x1xf32> to vector<2x256xf32>
    %209 = arith.mulf %208, %206 : vector<2x256xf32>
    %210 = arith.addf %182, %209 : vector<2x256xf32>
    %c192_i32 = arith.constant 192 : i32
    %211 = tpu.dynamic_rotate %80 by %c192_i32 dim 1 : vector<2x256xf32>, i32 -> vector<2x256xf32>
    %cst_87 = arith.constant 0.000000e+00 : f32
    %212 = vector.broadcast %cst_87 : f32 to vector<2x256xf32>
    %213 = arith.select %12, %211, %212 : vector<2x256xi1>, vector<2x256xf32>
    %c8_i32_88 = arith.constant 8 : i32
    %214 = tpu.dynamic_rotate %213 by %c8_i32_88 dim 1 : vector<2x256xf32>, i32 -> vector<2x256xf32>
    %cst_89 = arith.constant 0.000000e+00 : f32
    %215 = vector.broadcast %cst_89 : f32 to vector<2x256xf32>
    %216 = arith.select %14, %214, %215 : vector<2x256xi1>, vector<2x256xf32>
    %c1_i32_90 = arith.constant 1 : i32
    %217 = tpu.dynamic_rotate %216 by %c1_i32_90 dim 1 : vector<2x256xf32>, i32 -> vector<2x256xf32>
    %cst_91 = arith.constant 0.000000e+00 : f32
    %218 = vector.broadcast %cst_91 : f32 to vector<2x256xf32>
    %219 = arith.select %18, %217, %218 : vector<2x256xi1>, vector<2x256xf32>
    %c0_92 = arith.constant 0 : index
    %c18 = arith.constant 18 : index
    %220 = vector.load %arg6[%c0_92, %c18] : memref<2x27xf32, #tpu.memory_space<vmem>>, vector<2x1xf32>
    %221 = vector.broadcast %220 : vector<2x1xf32> to vector<2x256xf32>
    %222 = arith.mulf %221, %219 : vector<2x256xf32>
    %223 = arith.addf %189, %222 : vector<2x256xf32>
    %c0_93 = arith.constant 0 : index
    %c19 = arith.constant 19 : index
    %224 = vector.load %arg6[%c0_93, %c19] : memref<2x27xf32, #tpu.memory_space<vmem>>, vector<2x1xf32>
    %225 = vector.broadcast %224 : vector<2x1xf32> to vector<2x256xf32>
    %226 = arith.mulf %225, %216 : vector<2x256xf32>
    %227 = arith.addf %199, %226 : vector<2x256xf32>
    %c255_i32_94 = arith.constant 255 : i32
    %228 = tpu.dynamic_rotate %216 by %c255_i32_94 dim 1 : vector<2x256xf32>, i32 -> vector<2x256xf32>
    %cst_95 = arith.constant 0.000000e+00 : f32
    %229 = vector.broadcast %cst_95 : f32 to vector<2x256xf32>
    %230 = arith.select %20, %228, %229 : vector<2x256xi1>, vector<2x256xf32>
    %c0_96 = arith.constant 0 : index
    %c20 = arith.constant 20 : index
    %231 = vector.load %arg6[%c0_96, %c20] : memref<2x27xf32, #tpu.memory_space<vmem>>, vector<2x1xf32>
    %232 = vector.broadcast %231 : vector<2x1xf32> to vector<2x256xf32>
    %233 = arith.mulf %232, %230 : vector<2x256xf32>
    %234 = arith.addf %203, %233 : vector<2x256xf32>
    %c1_i32_97 = arith.constant 1 : i32
    %235 = tpu.dynamic_rotate %213 by %c1_i32_97 dim 1 : vector<2x256xf32>, i32 -> vector<2x256xf32>
    %cst_98 = arith.constant 0.000000e+00 : f32
    %236 = vector.broadcast %cst_98 : f32 to vector<2x256xf32>
    %237 = arith.select %18, %235, %236 : vector<2x256xi1>, vector<2x256xf32>
    %c0_99 = arith.constant 0 : index
    %c21 = arith.constant 21 : index
    %238 = vector.load %arg6[%c0_99, %c21] : memref<2x27xf32, #tpu.memory_space<vmem>>, vector<2x1xf32>
    %239 = vector.broadcast %238 : vector<2x1xf32> to vector<2x256xf32>
    %240 = arith.mulf %239, %237 : vector<2x256xf32>
    %241 = arith.addf %210, %240 : vector<2x256xf32>
    %c0_100 = arith.constant 0 : index
    %c22 = arith.constant 22 : index
    %242 = vector.load %arg6[%c0_100, %c22] : memref<2x27xf32, #tpu.memory_space<vmem>>, vector<2x1xf32>
    %243 = vector.broadcast %242 : vector<2x1xf32> to vector<2x256xf32>
    %244 = arith.mulf %243, %213 : vector<2x256xf32>
    %245 = arith.addf %223, %244 : vector<2x256xf32>
    %c255_i32_101 = arith.constant 255 : i32
    %246 = tpu.dynamic_rotate %213 by %c255_i32_101 dim 1 : vector<2x256xf32>, i32 -> vector<2x256xf32>
    %cst_102 = arith.constant 0.000000e+00 : f32
    %247 = vector.broadcast %cst_102 : f32 to vector<2x256xf32>
    %248 = arith.select %20, %246, %247 : vector<2x256xi1>, vector<2x256xf32>
    %c0_103 = arith.constant 0 : index
    %c23 = arith.constant 23 : index
    %249 = vector.load %arg6[%c0_103, %c23] : memref<2x27xf32, #tpu.memory_space<vmem>>, vector<2x1xf32>
    %250 = vector.broadcast %249 : vector<2x1xf32> to vector<2x256xf32>
    %251 = arith.mulf %250, %248 : vector<2x256xf32>
    %252 = arith.addf %227, %251 : vector<2x256xf32>
    %c248_i32_104 = arith.constant 248 : i32
    %253 = tpu.dynamic_rotate %213 by %c248_i32_104 dim 1 : vector<2x256xf32>, i32 -> vector<2x256xf32>
    %cst_105 = arith.constant 0.000000e+00 : f32
    %254 = vector.broadcast %cst_105 : f32 to vector<2x256xf32>
    %255 = arith.select %16, %253, %254 : vector<2x256xi1>, vector<2x256xf32>
    %c1_i32_106 = arith.constant 1 : i32
    %256 = tpu.dynamic_rotate %255 by %c1_i32_106 dim 1 : vector<2x256xf32>, i32 -> vector<2x256xf32>
    %cst_107 = arith.constant 0.000000e+00 : f32
    %257 = vector.broadcast %cst_107 : f32 to vector<2x256xf32>
    %258 = arith.select %18, %256, %257 : vector<2x256xi1>, vector<2x256xf32>
    %c0_108 = arith.constant 0 : index
    %c24 = arith.constant 24 : index
    %259 = vector.load %arg6[%c0_108, %c24] : memref<2x27xf32, #tpu.memory_space<vmem>>, vector<2x1xf32>
    %260 = vector.broadcast %259 : vector<2x1xf32> to vector<2x256xf32>
    %261 = arith.mulf %260, %258 : vector<2x256xf32>
    %262 = arith.addf %234, %261 : vector<2x256xf32>
    %c0_109 = arith.constant 0 : index
    %c25 = arith.constant 25 : index
    %263 = vector.load %arg6[%c0_109, %c25] : memref<2x27xf32, #tpu.memory_space<vmem>>, vector<2x1xf32>
    %264 = vector.broadcast %263 : vector<2x1xf32> to vector<2x256xf32>
    %265 = arith.mulf %264, %255 : vector<2x256xf32>
    %266 = arith.addf %241, %265 : vector<2x256xf32>
    %c255_i32_110 = arith.constant 255 : i32
    %267 = tpu.dynamic_rotate %255 by %c255_i32_110 dim 1 : vector<2x256xf32>, i32 -> vector<2x256xf32>
    %cst_111 = arith.constant 0.000000e+00 : f32
    %268 = vector.broadcast %cst_111 : f32 to vector<2x256xf32>
    %269 = arith.select %20, %267, %268 : vector<2x256xi1>, vector<2x256xf32>
    %c0_112 = arith.constant 0 : index
    %c26 = arith.constant 26 : index
    %270 = vector.load %arg6[%c0_112, %c26] : memref<2x27xf32, #tpu.memory_space<vmem>>, vector<2x1xf32>
    %271 = vector.broadcast %270 : vector<2x1xf32> to vector<2x256xf32>
    %272 = arith.mulf %271, %269 : vector<2x256xf32>
    %273 = arith.addf %245, %272 : vector<2x256xf32>
    %274 = arith.addf %262, %266 : vector<2x256xf32>
    %275 = arith.addf %273, %252 : vector<2x256xf32>
    %276 = arith.addf %274, %275 : vector<2x256xf32>
    %cst_113 = arith.constant dense<0.000000e+00> : vector<256xf32>
    %277 = vector.multi_reduction <add>, %276, %cst_113 [0] : vector<2x256xf32> to vector<256xf32>
    %278 = vector.shape_cast %277 : vector<256xf32> to vector<1x256xf32>
    %c0_114 = arith.constant 0 : index
    %c0_115 = arith.constant 0 : index
    %c0_116 = arith.constant 0 : index
    %279 = vector.load %arg7[%c0_114, %c0_115, %c0_116] : memref<2x1x256xf32, #tpu.memory_space<vmem>>, vector<1x1x256xf32>
    %280 = vector.shape_cast %279 : vector<1x1x256xf32> to vector<1x256xf32>
    %281 = vector.shape_cast %278 : vector<1x256xf32> to vector<1x1x256xf32>
    tpu.vector_store %arg7[%c0_114, %c0_115, %c0_116], %281 {strides = array<i32>} : memref<2x1x256xf32, #tpu.memory_space<vmem>>, vector<1x1x256xf32>,
    %282 = arith.negf %278 : vector<1x256xf32>
    %283 = math.exp %282 : vector<1x256xf32>
    %cst_117 = arith.constant 1.000000e+00 : f32
    %284 = vector.broadcast %cst_117 : f32 to vector<1x256xf32>
    %285 = arith.addf %284, %283 : vector<1x256xf32>
    %286 = arith.divf %284, %285 : vector<1x256xf32>
    %c0_118 = arith.constant 0 : index
    %c0_119 = arith.constant 0 : index
    %c0_120 = arith.constant 0 : index
    %287 = vector.load %arg8[%c0_118, %c0_119, %c0_120] : memref<2x8x256xf32, #tpu.memory_space<vmem>>, vector<1x8x256xf32>
    %288 = vector.shape_cast %287 : vector<1x8x256xf32> to vector<8x256xf32>
    %289 = vector.broadcast %286 : vector<1x256xf32> to vector<8x256xf32>
    %290 = arith.mulf %288, %289 : vector<8x256xf32>
    %c0_121 = arith.constant 0 : index
    %c0_122 = arith.constant 0 : index
    %c0_123 = arith.constant 0 : index
    %291 = vector.load %arg8[%c0_121, %c0_122, %c0_123] : memref<2x8x256xf32, #tpu.memory_space<vmem>>, vector<1x8x256xf32>
    %292 = vector.shape_cast %291 : vector<1x8x256xf32> to vector<8x256xf32>
    %293 = vector.shape_cast %290 : vector<8x256xf32> to vector<1x8x256xf32>
    tpu.vector_store %arg8[%c0_121, %c0_122, %c0_123], %293 {strides = array<i32>} : memref<2x8x256xf32, #tpu.memory_space<vmem>>, vector<1x8x256xf32>,
    %c1_124 = arith.constant 1 : index
    %c0_125 = arith.constant 0 : index
    %c0_126 = arith.constant 0 : index
    %294 = vector.load %arg1[%c1_124, %c0_125, %c0_126] : memref<2x8x256xf32, #tpu.memory_space<vmem>>, vector<1x8x256xf32>
    %295 = vector.shape_cast %294 : vector<1x8x256xf32> to vector<8x256xf32>
    %cst_127 = arith.constant dense<0.000000e+00> : vector<8xf32>
    %296 = vector.multi_reduction <add>, %295, %cst_127 [1] : vector<8x256xf32> to vector<8xf32>
    %297 = vector.shape_cast %296 : vector<8xf32> to vector<8x1xf32>
    %cst_128 = arith.constant 2.560000e+02 : f32
    %298 = vector.broadcast %cst_128 : f32 to vector<8x1xf32>
    %299 = arith.divf %297, %298 : vector<8x1xf32>
    %cst_129 = arith.constant dense<0xFF800000> : vector<8xf32>
    %300 = vector.multi_reduction <maximumf>, %295, %cst_129 [1] : vector<8x256xf32> to vector<8xf32>
    %301 = vector.shape_cast %300 : vector<8xf32> to vector<8x1xf32>
    %302 = tpu.concatenate %299, %301 in 1 : vector<8x1xf32>, vector<8x1xf32> -> vector<8x2xf32>
    %c0_130 = arith.constant 0 : index
    %c0_131 = arith.constant 0 : index
    %c0_132 = arith.constant 0 : index
    %303 = vector.load %arg2[%c0_130, %c0_131, %c0_132] : memref<2x8x1xf32, #tpu.memory_space<vmem>>, vector<1x8x1xf32>
    %304 = vector.shape_cast %303 : vector<1x8x1xf32> to vector<8x1xf32>
    %305 = vector.broadcast %304 : vector<8x1xf32> to vector<8x2xf32>
    %306 = arith.mulf %305, %302 : vector<8x2xf32>
    %cst_133 = arith.constant dense<0.000000e+00> : vector<2xf32>
    %307 = vector.multi_reduction <add>, %306, %cst_133 [0] : vector<8x2xf32> to vector<2xf32>
    %308 = vector.shape_cast %307 : vector<2xf32> to vector<1x2xf32>
    %c0_134 = arith.constant 0 : index
    %309 = memref.load %arg3[%c0_134] : memref<2xf32, #tpu.memory_space<smem>>
    %310 = vector.broadcast %309 : f32 to vector<1x2xf32>
    %311 = arith.addf %308, %310 : vector<1x2xf32>
    %cst_135 = arith.constant 0.000000e+00 : f32
    %312 = vector.broadcast %cst_135 : f32 to vector<1x2xf32>
    %313 = arith.maximumf %311, %312 : vector<1x2xf32>
    %c1_136 = arith.constant 1 : index
    %c0_137 = arith.constant 0 : index
    %c0_138 = arith.constant 0 : index
    %314 = vector.load %arg2[%c1_136, %c0_137, %c0_138] : memref<2x8x1xf32, #tpu.memory_space<vmem>>, vector<1x8x1xf32>
    %315 = vector.shape_cast %314 : vector<1x8x1xf32> to vector<8x1xf32>
    %316 = vector.broadcast %315 : vector<8x1xf32> to vector<8x2xf32>
    %317 = arith.mulf %316, %302 : vector<8x2xf32>
    %cst_139 = arith.constant dense<0.000000e+00> : vector<2xf32>
    %318 = vector.multi_reduction <add>, %317, %cst_139 [0] : vector<8x2xf32> to vector<2xf32>
    %319 = vector.shape_cast %318 : vector<2xf32> to vector<1x2xf32>
    %c1_140 = arith.constant 1 : index
    %320 = memref.load %arg3[%c1_140] : memref<2xf32, #tpu.memory_space<smem>>
    %321 = vector.broadcast %320 : f32 to vector<1x2xf32>
    %322 = arith.addf %319, %321 : vector<1x2xf32>
    %cst_141 = arith.constant 0.000000e+00 : f32
    %323 = vector.broadcast %cst_141 : f32 to vector<1x2xf32>
    %324 = arith.maximumf %322, %323 : vector<1x2xf32>
    %c0_142 = arith.constant 0 : index
    %c0_143 = arith.constant 0 : index
    %325 = vector.load %arg4[%c0_142, %c0_143] : memref<8x2xf32, #tpu.memory_space<vmem>>, vector<8x1xf32>
    %326 = vector.broadcast %325 : vector<8x1xf32> to vector<8x2xf32>
    %327 = vector.broadcast %313 : vector<1x2xf32> to vector<8x2xf32>
    %328 = arith.mulf %326, %327 : vector<8x2xf32>
    %c0_144 = arith.constant 0 : index
    %c1_145 = arith.constant 1 : index
    %329 = vector.load %arg4[%c0_144, %c1_145] : memref<8x2xf32, #tpu.memory_space<vmem>>, vector<8x1xf32>
    %330 = vector.broadcast %329 : vector<8x1xf32> to vector<8x2xf32>
    %331 = vector.broadcast %324 : vector<1x2xf32> to vector<8x2xf32>
    %332 = arith.mulf %330, %331 : vector<8x2xf32>
    %333 = arith.addf %328, %332 : vector<8x2xf32>
    %c0_146 = arith.constant 0 : index
    %c0_147 = arith.constant 0 : index
    %334 = vector.load %arg5[%c0_146, %c0_147] : memref<8x1xf32, #tpu.memory_space<vmem>>, vector<8x1xf32>
    %335 = vector.broadcast %334 : vector<8x1xf32> to vector<8x2xf32>
    %336 = arith.addf %333, %335 : vector<8x2xf32>
    %337 = vector.extract_strided_slice %336 {offsets = [0, 0], sizes = [8, 1], strides = [1, 1]} : vector<8x2xf32> to vector<8x1xf32>
    %338 = vector.extract_strided_slice %336 {offsets = [0, 1], sizes = [8, 1], strides = [1, 1]} : vector<8x2xf32> to vector<8x1xf32>
    %339 = arith.addf %337, %338 : vector<8x1xf32>
    %340 = arith.negf %339 : vector<8x1xf32>
    %341 = math.exp %340 : vector<8x1xf32>
    %cst_148 = arith.constant 1.000000e+00 : f32
    %342 = vector.broadcast %cst_148 : f32 to vector<8x1xf32>
    %343 = arith.addf %342, %341 : vector<8x1xf32>
    %344 = arith.divf %342, %343 : vector<8x1xf32>
    %345 = vector.broadcast %344 : vector<8x1xf32> to vector<8x256xf32>
    %346 = arith.mulf %295, %345 : vector<8x256xf32>
    %cst_149 = arith.constant dense<0.000000e+00> : vector<256xf32>
    %347 = vector.multi_reduction <add>, %346, %cst_149 [0] : vector<8x256xf32> to vector<256xf32>
    %348 = vector.shape_cast %347 : vector<256xf32> to vector<1x256xf32>
    %cst_150 = arith.constant 8.000000e+00 : f32
    %349 = vector.broadcast %cst_150 : f32 to vector<1x256xf32>
    %350 = arith.divf %348, %349 : vector<1x256xf32>
    %cst_151 = arith.constant dense<0xFF800000> : vector<256xf32>
    %351 = vector.multi_reduction <maximumf>, %346, %cst_151 [0] : vector<8x256xf32> to vector<256xf32>
    %352 = vector.shape_cast %351 : vector<256xf32> to vector<1x256xf32>
    %353 = tpu.concatenate %350, %352 in 0 : vector<1x256xf32>, vector<1x256xf32> -> vector<2x256xf32>
    %c1_152 = arith.constant 1 : index
    %c0_153 = arith.constant 0 : index
    %c0_154 = arith.constant 0 : index
    %354 = vector.load %arg8[%c1_152, %c0_153, %c0_154] : memref<2x8x256xf32, #tpu.memory_space<vmem>>, vector<1x8x256xf32>
    %355 = vector.shape_cast %354 : vector<1x8x256xf32> to vector<8x256xf32>
    %356 = vector.shape_cast %346 : vector<8x256xf32> to vector<1x8x256xf32>
    tpu.vector_store %arg8[%c1_152, %c0_153, %c0_154], %356 {strides = array<i32>} : memref<2x8x256xf32, #tpu.memory_space<vmem>>, vector<1x8x256xf32>,
    %cst_155 = arith.constant 0.000000e+00 : f32
    %357 = vector.broadcast %cst_155 : f32 to vector<2x256xf32>
    %cst_156 = arith.constant 0.000000e+00 : f32
    %358 = vector.broadcast %cst_156 : f32 to vector<2x256xf32>
    %cst_157 = arith.constant 0.000000e+00 : f32
    %359 = vector.broadcast %cst_157 : f32 to vector<2x256xf32>
    %cst_158 = arith.constant 0.000000e+00 : f32
    %360 = vector.broadcast %cst_158 : f32 to vector<2x256xf32>
    %c64_i32_159 = arith.constant 64 : i32
    %361 = tpu.dynamic_rotate %353 by %c64_i32_159 dim 1 : vector<2x256xf32>, i32 -> vector<2x256xf32>
    %cst_160 = arith.constant 0.000000e+00 : f32
    %362 = vector.broadcast %cst_160 : f32 to vector<2x256xf32>
    %363 = arith.select %10, %361, %362 : vector<2x256xi1>, vector<2x256xf32>
    %c8_i32_161 = arith.constant 8 : i32
    %364 = tpu.dynamic_rotate %363 by %c8_i32_161 dim 1 : vector<2x256xf32>, i32 -> vector<2x256xf32>
    %cst_162 = arith.constant 0.000000e+00 : f32
    %365 = vector.broadcast %cst_162 : f32 to vector<2x256xf32>
    %366 = arith.select %14, %364, %365 : vector<2x256xi1>, vector<2x256xf32>
    %c1_i32_163 = arith.constant 1 : i32
    %367 = tpu.dynamic_rotate %366 by %c1_i32_163 dim 1 : vector<2x256xf32>, i32 -> vector<2x256xf32>
    %cst_164 = arith.constant 0.000000e+00 : f32
    %368 = vector.broadcast %cst_164 : f32 to vector<2x256xf32>
    %369 = arith.select %18, %367, %368 : vector<2x256xi1>, vector<2x256xf32>
    %c0_165 = arith.constant 0 : index
    %c0_166 = arith.constant 0 : index
    %370 = vector.load %arg6[%c0_165, %c0_166] : memref<2x27xf32, #tpu.memory_space<vmem>>, vector<2x1xf32>
    %371 = vector.broadcast %370 : vector<2x1xf32> to vector<2x256xf32>
    %372 = arith.mulf %371, %369 : vector<2x256xf32>
    %373 = arith.addf %357, %372 : vector<2x256xf32>
    %c0_167 = arith.constant 0 : index
    %c1_168 = arith.constant 1 : index
    %374 = vector.load %arg6[%c0_167, %c1_168] : memref<2x27xf32, #tpu.memory_space<vmem>>, vector<2x1xf32>
    %375 = vector.broadcast %374 : vector<2x1xf32> to vector<2x256xf32>
    %376 = arith.mulf %375, %366 : vector<2x256xf32>
    %377 = arith.addf %358, %376 : vector<2x256xf32>
    %c255_i32_169 = arith.constant 255 : i32
    %378 = tpu.dynamic_rotate %366 by %c255_i32_169 dim 1 : vector<2x256xf32>, i32 -> vector<2x256xf32>
    %cst_170 = arith.constant 0.000000e+00 : f32
    %379 = vector.broadcast %cst_170 : f32 to vector<2x256xf32>
    %380 = arith.select %20, %378, %379 : vector<2x256xi1>, vector<2x256xf32>
    %c0_171 = arith.constant 0 : index
    %c2_172 = arith.constant 2 : index
    %381 = vector.load %arg6[%c0_171, %c2_172] : memref<2x27xf32, #tpu.memory_space<vmem>>, vector<2x1xf32>
    %382 = vector.broadcast %381 : vector<2x1xf32> to vector<2x256xf32>
    %383 = arith.mulf %382, %380 : vector<2x256xf32>
    %384 = arith.addf %359, %383 : vector<2x256xf32>
    %c1_i32_173 = arith.constant 1 : i32
    %385 = tpu.dynamic_rotate %363 by %c1_i32_173 dim 1 : vector<2x256xf32>, i32 -> vector<2x256xf32>
    %cst_174 = arith.constant 0.000000e+00 : f32
    %386 = vector.broadcast %cst_174 : f32 to vector<2x256xf32>
    %387 = arith.select %18, %385, %386 : vector<2x256xi1>, vector<2x256xf32>
    %c0_175 = arith.constant 0 : index
    %c3_176 = arith.constant 3 : index
    %388 = vector.load %arg6[%c0_175, %c3_176] : memref<2x27xf32, #tpu.memory_space<vmem>>, vector<2x1xf32>
    %389 = vector.broadcast %388 : vector<2x1xf32> to vector<2x256xf32>
    %390 = arith.mulf %389, %387 : vector<2x256xf32>
    %391 = arith.addf %360, %390 : vector<2x256xf32>
    %c0_177 = arith.constant 0 : index
    %c4_178 = arith.constant 4 : index
    %392 = vector.load %arg6[%c0_177, %c4_178] : memref<2x27xf32, #tpu.memory_space<vmem>>, vector<2x1xf32>
    %393 = vector.broadcast %392 : vector<2x1xf32> to vector<2x256xf32>
    %394 = arith.mulf %393, %363 : vector<2x256xf32>
    %395 = arith.addf %373, %394 : vector<2x256xf32>
    %c255_i32_179 = arith.constant 255 : i32
    %396 = tpu.dynamic_rotate %363 by %c255_i32_179 dim 1 : vector<2x256xf32>, i32 -> vector<2x256xf32>
    %cst_180 = arith.constant 0.000000e+00 : f32
    %397 = vector.broadcast %cst_180 : f32 to vector<2x256xf32>
    %398 = arith.select %20, %396, %397 : vector<2x256xi1>, vector<2x256xf32>
    %c0_181 = arith.constant 0 : index
    %c5_182 = arith.constant 5 : index
    %399 = vector.load %arg6[%c0_181, %c5_182] : memref<2x27xf32, #tpu.memory_space<vmem>>, vector<2x1xf32>
    %400 = vector.broadcast %399 : vector<2x1xf32> to vector<2x256xf32>
    %401 = arith.mulf %400, %398 : vector<2x256xf32>
    %402 = arith.addf %377, %401 : vector<2x256xf32>
    %c248_i32_183 = arith.constant 248 : i32
    %403 = tpu.dynamic_rotate %363 by %c248_i32_183 dim 1 : vector<2x256xf32>, i32 -> vector<2x256xf32>
    %cst_184 = arith.constant 0.000000e+00 : f32
    %404 = vector.broadcast %cst_184 : f32 to vector<2x256xf32>
    %405 = arith.select %16, %403, %404 : vector<2x256xi1>, vector<2x256xf32>
    %c1_i32_185 = arith.constant 1 : i32
    %406 = tpu.dynamic_rotate %405 by %c1_i32_185 dim 1 : vector<2x256xf32>, i32 -> vector<2x256xf32>
    %cst_186 = arith.constant 0.000000e+00 : f32
    %407 = vector.broadcast %cst_186 : f32 to vector<2x256xf32>
    %408 = arith.select %18, %406, %407 : vector<2x256xi1>, vector<2x256xf32>
    %c0_187 = arith.constant 0 : index
    %c6_188 = arith.constant 6 : index
    %409 = vector.load %arg6[%c0_187, %c6_188] : memref<2x27xf32, #tpu.memory_space<vmem>>, vector<2x1xf32>
    %410 = vector.broadcast %409 : vector<2x1xf32> to vector<2x256xf32>
    %411 = arith.mulf %410, %408 : vector<2x256xf32>
    %412 = arith.addf %384, %411 : vector<2x256xf32>
    %c0_189 = arith.constant 0 : index
    %c7_190 = arith.constant 7 : index
    %413 = vector.load %arg6[%c0_189, %c7_190] : memref<2x27xf32, #tpu.memory_space<vmem>>, vector<2x1xf32>
    %414 = vector.broadcast %413 : vector<2x1xf32> to vector<2x256xf32>
    %415 = arith.mulf %414, %405 : vector<2x256xf32>
    %416 = arith.addf %391, %415 : vector<2x256xf32>
    %c255_i32_191 = arith.constant 255 : i32
    %417 = tpu.dynamic_rotate %405 by %c255_i32_191 dim 1 : vector<2x256xf32>, i32 -> vector<2x256xf32>
    %cst_192 = arith.constant 0.000000e+00 : f32
    %418 = vector.broadcast %cst_192 : f32 to vector<2x256xf32>
    %419 = arith.select %20, %417, %418 : vector<2x256xi1>, vector<2x256xf32>
    %c0_193 = arith.constant 0 : index
    %c8_194 = arith.constant 8 : index
    %420 = vector.load %arg6[%c0_193, %c8_194] : memref<2x27xf32, #tpu.memory_space<vmem>>, vector<2x1xf32>
    %421 = vector.broadcast %420 : vector<2x1xf32> to vector<2x256xf32>
    %422 = arith.mulf %421, %419 : vector<2x256xf32>
    %423 = arith.addf %395, %422 : vector<2x256xf32>
    %c8_i32_195 = arith.constant 8 : i32
    %424 = tpu.dynamic_rotate %353 by %c8_i32_195 dim 1 : vector<2x256xf32>, i32 -> vector<2x256xf32>
    %cst_196 = arith.constant 0.000000e+00 : f32
    %425 = vector.broadcast %cst_196 : f32 to vector<2x256xf32>
    %426 = arith.select %14, %424, %425 : vector<2x256xi1>, vector<2x256xf32>
    %c1_i32_197 = arith.constant 1 : i32
    %427 = tpu.dynamic_rotate %426 by %c1_i32_197 dim 1 : vector<2x256xf32>, i32 -> vector<2x256xf32>
    %cst_198 = arith.constant 0.000000e+00 : f32
    %428 = vector.broadcast %cst_198 : f32 to vector<2x256xf32>
    %429 = arith.select %18, %427, %428 : vector<2x256xi1>, vector<2x256xf32>
    %c0_199 = arith.constant 0 : index
    %c9_200 = arith.constant 9 : index
    %430 = vector.load %arg6[%c0_199, %c9_200] : memref<2x27xf32, #tpu.memory_space<vmem>>, vector<2x1xf32>
    %431 = vector.broadcast %430 : vector<2x1xf32> to vector<2x256xf32>
    %432 = arith.mulf %431, %429 : vector<2x256xf32>
    %433 = arith.addf %402, %432 : vector<2x256xf32>
    %c0_201 = arith.constant 0 : index
    %c10_202 = arith.constant 10 : index
    %434 = vector.load %arg6[%c0_201, %c10_202] : memref<2x27xf32, #tpu.memory_space<vmem>>, vector<2x1xf32>
    %435 = vector.broadcast %434 : vector<2x1xf32> to vector<2x256xf32>
    %436 = arith.mulf %435, %426 : vector<2x256xf32>
    %437 = arith.addf %412, %436 : vector<2x256xf32>
    %c255_i32_203 = arith.constant 255 : i32
    %438 = tpu.dynamic_rotate %426 by %c255_i32_203 dim 1 : vector<2x256xf32>, i32 -> vector<2x256xf32>
    %cst_204 = arith.constant 0.000000e+00 : f32
    %439 = vector.broadcast %cst_204 : f32 to vector<2x256xf32>
    %440 = arith.select %20, %438, %439 : vector<2x256xi1>, vector<2x256xf32>
    %c0_205 = arith.constant 0 : index
    %c11_206 = arith.constant 11 : index
    %441 = vector.load %arg6[%c0_205, %c11_206] : memref<2x27xf32, #tpu.memory_space<vmem>>, vector<2x1xf32>
    %442 = vector.broadcast %441 : vector<2x1xf32> to vector<2x256xf32>
    %443 = arith.mulf %442, %440 : vector<2x256xf32>
    %444 = arith.addf %416, %443 : vector<2x256xf32>
    %c1_i32_207 = arith.constant 1 : i32
    %445 = tpu.dynamic_rotate %353 by %c1_i32_207 dim 1 : vector<2x256xf32>, i32 -> vector<2x256xf32>
    %cst_208 = arith.constant 0.000000e+00 : f32
    %446 = vector.broadcast %cst_208 : f32 to vector<2x256xf32>
    %447 = arith.select %18, %445, %446 : vector<2x256xi1>, vector<2x256xf32>
    %c0_209 = arith.constant 0 : index
    %c12_210 = arith.constant 12 : index
    %448 = vector.load %arg6[%c0_209, %c12_210] : memref<2x27xf32, #tpu.memory_space<vmem>>, vector<2x1xf32>
    %449 = vector.broadcast %448 : vector<2x1xf32> to vector<2x256xf32>
    %450 = arith.mulf %449, %447 : vector<2x256xf32>
    %451 = arith.addf %423, %450 : vector<2x256xf32>
    %c0_211 = arith.constant 0 : index
    %c13_212 = arith.constant 13 : index
    %452 = vector.load %arg6[%c0_211, %c13_212] : memref<2x27xf32, #tpu.memory_space<vmem>>, vector<2x1xf32>
    %453 = vector.broadcast %452 : vector<2x1xf32> to vector<2x256xf32>
    %454 = arith.mulf %453, %353 : vector<2x256xf32>
    %455 = arith.addf %433, %454 : vector<2x256xf32>
    %c255_i32_213 = arith.constant 255 : i32
    %456 = tpu.dynamic_rotate %353 by %c255_i32_213 dim 1 : vector<2x256xf32>, i32 -> vector<2x256xf32>
    %cst_214 = arith.constant 0.000000e+00 : f32
    %457 = vector.broadcast %cst_214 : f32 to vector<2x256xf32>
    %458 = arith.select %20, %456, %457 : vector<2x256xi1>, vector<2x256xf32>
    %c0_215 = arith.constant 0 : index
    %c14_216 = arith.constant 14 : index
    %459 = vector.load %arg6[%c0_215, %c14_216] : memref<2x27xf32, #tpu.memory_space<vmem>>, vector<2x1xf32>
    %460 = vector.broadcast %459 : vector<2x1xf32> to vector<2x256xf32>
    %461 = arith.mulf %460, %458 : vector<2x256xf32>
    %462 = arith.addf %437, %461 : vector<2x256xf32>
    %c248_i32_217 = arith.constant 248 : i32
    %463 = tpu.dynamic_rotate %353 by %c248_i32_217 dim 1 : vector<2x256xf32>, i32 -> vector<2x256xf32>
    %cst_218 = arith.constant 0.000000e+00 : f32
    %464 = vector.broadcast %cst_218 : f32 to vector<2x256xf32>
    %465 = arith.select %16, %463, %464 : vector<2x256xi1>, vector<2x256xf32>
    %c1_i32_219 = arith.constant 1 : i32
    %466 = tpu.dynamic_rotate %465 by %c1_i32_219 dim 1 : vector<2x256xf32>, i32 -> vector<2x256xf32>
    %cst_220 = arith.constant 0.000000e+00 : f32
    %467 = vector.broadcast %cst_220 : f32 to vector<2x256xf32>
    %468 = arith.select %18, %466, %467 : vector<2x256xi1>, vector<2x256xf32>
    %c0_221 = arith.constant 0 : index
    %c15_222 = arith.constant 15 : index
    %469 = vector.load %arg6[%c0_221, %c15_222] : memref<2x27xf32, #tpu.memory_space<vmem>>, vector<2x1xf32>
    %470 = vector.broadcast %469 : vector<2x1xf32> to vector<2x256xf32>
    %471 = arith.mulf %470, %468 : vector<2x256xf32>
    %472 = arith.addf %444, %471 : vector<2x256xf32>
    %c0_223 = arith.constant 0 : index
    %c16_224 = arith.constant 16 : index
    %473 = vector.load %arg6[%c0_223, %c16_224] : memref<2x27xf32, #tpu.memory_space<vmem>>, vector<2x1xf32>
    %474 = vector.broadcast %473 : vector<2x1xf32> to vector<2x256xf32>
    %475 = arith.mulf %474, %465 : vector<2x256xf32>
    %476 = arith.addf %451, %475 : vector<2x256xf32>
    %c255_i32_225 = arith.constant 255 : i32
    %477 = tpu.dynamic_rotate %465 by %c255_i32_225 dim 1 : vector<2x256xf32>, i32 -> vector<2x256xf32>
    %cst_226 = arith.constant 0.000000e+00 : f32
    %478 = vector.broadcast %cst_226 : f32 to vector<2x256xf32>
    %479 = arith.select %20, %477, %478 : vector<2x256xi1>, vector<2x256xf32>
    %c0_227 = arith.constant 0 : index
    %c17_228 = arith.constant 17 : index
    %480 = vector.load %arg6[%c0_227, %c17_228] : memref<2x27xf32, #tpu.memory_space<vmem>>, vector<2x1xf32>
    %481 = vector.broadcast %480 : vector<2x1xf32> to vector<2x256xf32>
    %482 = arith.mulf %481, %479 : vector<2x256xf32>
    %483 = arith.addf %455, %482 : vector<2x256xf32>
    %c192_i32_229 = arith.constant 192 : i32
    %484 = tpu.dynamic_rotate %353 by %c192_i32_229 dim 1 : vector<2x256xf32>, i32 -> vector<2x256xf32>
    %cst_230 = arith.constant 0.000000e+00 : f32
    %485 = vector.broadcast %cst_230 : f32 to vector<2x256xf32>
    %486 = arith.select %12, %484, %485 : vector<2x256xi1>, vector<2x256xf32>
    %c8_i32_231 = arith.constant 8 : i32
    %487 = tpu.dynamic_rotate %486 by %c8_i32_231 dim 1 : vector<2x256xf32>, i32 -> vector<2x256xf32>
    %cst_232 = arith.constant 0.000000e+00 : f32
    %488 = vector.broadcast %cst_232 : f32 to vector<2x256xf32>
    %489 = arith.select %14, %487, %488 : vector<2x256xi1>, vector<2x256xf32>
    %c1_i32_233 = arith.constant 1 : i32
    %490 = tpu.dynamic_rotate %489 by %c1_i32_233 dim 1 : vector<2x256xf32>, i32 -> vector<2x256xf32>
    %cst_234 = arith.constant 0.000000e+00 : f32
    %491 = vector.broadcast %cst_234 : f32 to vector<2x256xf32>
    %492 = arith.select %18, %490, %491 : vector<2x256xi1>, vector<2x256xf32>
    %c0_235 = arith.constant 0 : index
    %c18_236 = arith.constant 18 : index
    %493 = vector.load %arg6[%c0_235, %c18_236] : memref<2x27xf32, #tpu.memory_space<vmem>>, vector<2x1xf32>
    %494 = vector.broadcast %493 : vector<2x1xf32> to vector<2x256xf32>
    %495 = arith.mulf %494, %492 : vector<2x256xf32>
    %496 = arith.addf %462, %495 : vector<2x256xf32>
    %c0_237 = arith.constant 0 : index
    %c19_238 = arith.constant 19 : index
    %497 = vector.load %arg6[%c0_237, %c19_238] : memref<2x27xf32, #tpu.memory_space<vmem>>, vector<2x1xf32>
    %498 = vector.broadcast %497 : vector<2x1xf32> to vector<2x256xf32>
    %499 = arith.mulf %498, %489 : vector<2x256xf32>
    %500 = arith.addf %472, %499 : vector<2x256xf32>
    %c255_i32_239 = arith.constant 255 : i32
    %501 = tpu.dynamic_rotate %489 by %c255_i32_239 dim 1 : vector<2x256xf32>, i32 -> vector<2x256xf32>
    %cst_240 = arith.constant 0.000000e+00 : f32
    %502 = vector.broadcast %cst_240 : f32 to vector<2x256xf32>
    %503 = arith.select %20, %501, %502 : vector<2x256xi1>, vector<2x256xf32>
    %c0_241 = arith.constant 0 : index
    %c20_242 = arith.constant 20 : index
    %504 = vector.load %arg6[%c0_241, %c20_242] : memref<2x27xf32, #tpu.memory_space<vmem>>, vector<2x1xf32>
    %505 = vector.broadcast %504 : vector<2x1xf32> to vector<2x256xf32>
    %506 = arith.mulf %505, %503 : vector<2x256xf32>
    %507 = arith.addf %476, %506 : vector<2x256xf32>
    %c1_i32_243 = arith.constant 1 : i32
    %508 = tpu.dynamic_rotate %486 by %c1_i32_243 dim 1 : vector<2x256xf32>, i32 -> vector<2x256xf32>
    %cst_244 = arith.constant 0.000000e+00 : f32
    %509 = vector.broadcast %cst_244 : f32 to vector<2x256xf32>
    %510 = arith.select %18, %508, %509 : vector<2x256xi1>, vector<2x256xf32>
    %c0_245 = arith.constant 0 : index
    %c21_246 = arith.constant 21 : index
    %511 = vector.load %arg6[%c0_245, %c21_246] : memref<2x27xf32, #tpu.memory_space<vmem>>, vector<2x1xf32>
    %512 = vector.broadcast %511 : vector<2x1xf32> to vector<2x256xf32>
    %513 = arith.mulf %512, %510 : vector<2x256xf32>
    %514 = arith.addf %483, %513 : vector<2x256xf32>
    %c0_247 = arith.constant 0 : index
    %c22_248 = arith.constant 22 : index
    %515 = vector.load %arg6[%c0_247, %c22_248] : memref<2x27xf32, #tpu.memory_space<vmem>>, vector<2x1xf32>
    %516 = vector.broadcast %515 : vector<2x1xf32> to vector<2x256xf32>
    %517 = arith.mulf %516, %486 : vector<2x256xf32>
    %518 = arith.addf %496, %517 : vector<2x256xf32>
    %c255_i32_249 = arith.constant 255 : i32
    %519 = tpu.dynamic_rotate %486 by %c255_i32_249 dim 1 : vector<2x256xf32>, i32 -> vector<2x256xf32>
    %cst_250 = arith.constant 0.000000e+00 : f32
    %520 = vector.broadcast %cst_250 : f32 to vector<2x256xf32>
    %521 = arith.select %20, %519, %520 : vector<2x256xi1>, vector<2x256xf32>
    %c0_251 = arith.constant 0 : index
    %c23_252 = arith.constant 23 : index
    %522 = vector.load %arg6[%c0_251, %c23_252] : memref<2x27xf32, #tpu.memory_space<vmem>>, vector<2x1xf32>
    %523 = vector.broadcast %522 : vector<2x1xf32> to vector<2x256xf32>
    %524 = arith.mulf %523, %521 : vector<2x256xf32>
    %525 = arith.addf %500, %524 : vector<2x256xf32>
    %c248_i32_253 = arith.constant 248 : i32
    %526 = tpu.dynamic_rotate %486 by %c248_i32_253 dim 1 : vector<2x256xf32>, i32 -> vector<2x256xf32>
    %cst_254 = arith.constant 0.000000e+00 : f32
    %527 = vector.broadcast %cst_254 : f32 to vector<2x256xf32>
    %528 = arith.select %16, %526, %527 : vector<2x256xi1>, vector<2x256xf32>
    %c1_i32_255 = arith.constant 1 : i32
    %529 = tpu.dynamic_rotate %528 by %c1_i32_255 dim 1 : vector<2x256xf32>, i32 -> vector<2x256xf32>
    %cst_256 = arith.constant 0.000000e+00 : f32
    %530 = vector.broadcast %cst_256 : f32 to vector<2x256xf32>
    %531 = arith.select %18, %529, %530 : vector<2x256xi1>, vector<2x256xf32>
    %c0_257 = arith.constant 0 : index
    %c24_258 = arith.constant 24 : index
    %532 = vector.load %arg6[%c0_257, %c24_258] : memref<2x27xf32, #tpu.memory_space<vmem>>, vector<2x1xf32>
    %533 = vector.broadcast %532 : vector<2x1xf32> to vector<2x256xf32>
    %534 = arith.mulf %533, %531 : vector<2x256xf32>
    %535 = arith.addf %507, %534 : vector<2x256xf32>
    %c0_259 = arith.constant 0 : index
    %c25_260 = arith.constant 25 : index
    %536 = vector.load %arg6[%c0_259, %c25_260] : memref<2x27xf32, #tpu.memory_space<vmem>>, vector<2x1xf32>
    %537 = vector.broadcast %536 : vector<2x1xf32> to vector<2x256xf32>
    %538 = arith.mulf %537, %528 : vector<2x256xf32>
    %539 = arith.addf %514, %538 : vector<2x256xf32>
    %c255_i32_261 = arith.constant 255 : i32
    %540 = tpu.dynamic_rotate %528 by %c255_i32_261 dim 1 : vector<2x256xf32>, i32 -> vector<2x256xf32>
    %cst_262 = arith.constant 0.000000e+00 : f32
    %541 = vector.broadcast %cst_262 : f32 to vector<2x256xf32>
    %542 = arith.select %20, %540, %541 : vector<2x256xi1>, vector<2x256xf32>
    %c0_263 = arith.constant 0 : index
    %c26_264 = arith.constant 26 : index
    %543 = vector.load %arg6[%c0_263, %c26_264] : memref<2x27xf32, #tpu.memory_space<vmem>>, vector<2x1xf32>
    %544 = vector.broadcast %543 : vector<2x1xf32> to vector<2x256xf32>
    %545 = arith.mulf %544, %542 : vector<2x256xf32>
    %546 = arith.addf %518, %545 : vector<2x256xf32>
    %547 = arith.addf %535, %539 : vector<2x256xf32>
    %548 = arith.addf %546, %525 : vector<2x256xf32>
    %549 = arith.addf %547, %548 : vector<2x256xf32>
    %cst_265 = arith.constant dense<0.000000e+00> : vector<256xf32>
    %550 = vector.multi_reduction <add>, %549, %cst_265 [0] : vector<2x256xf32> to vector<256xf32>
    %551 = vector.shape_cast %550 : vector<256xf32> to vector<1x256xf32>
    %c1_266 = arith.constant 1 : index
    %c0_267 = arith.constant 0 : index
    %c0_268 = arith.constant 0 : index
    %552 = vector.load %arg7[%c1_266, %c0_267, %c0_268] : memref<2x1x256xf32, #tpu.memory_space<vmem>>, vector<1x1x256xf32>
    %553 = vector.shape_cast %552 : vector<1x1x256xf32> to vector<1x256xf32>
    %554 = vector.shape_cast %551 : vector<1x256xf32> to vector<1x1x256xf32>
    tpu.vector_store %arg7[%c1_266, %c0_267, %c0_268], %554 {strides = array<i32>} : memref<2x1x256xf32, #tpu.memory_space<vmem>>, vector<1x1x256xf32>,
    %555 = arith.negf %551 : vector<1x256xf32>
    %556 = math.exp %555 : vector<1x256xf32>
    %cst_269 = arith.constant 1.000000e+00 : f32
    %557 = vector.broadcast %cst_269 : f32 to vector<1x256xf32>
    %558 = arith.addf %557, %556 : vector<1x256xf32>
    %559 = arith.divf %557, %558 : vector<1x256xf32>
    %c1_270 = arith.constant 1 : index
    %c0_271 = arith.constant 0 : index
    %c0_272 = arith.constant 0 : index
    %560 = vector.load %arg8[%c1_270, %c0_271, %c0_272] : memref<2x8x256xf32, #tpu.memory_space<vmem>>, vector<1x8x256xf32>
    %561 = vector.shape_cast %560 : vector<1x8x256xf32> to vector<8x256xf32>
    %562 = vector.broadcast %559 : vector<1x256xf32> to vector<8x256xf32>
    %563 = arith.mulf %561, %562 : vector<8x256xf32>
    %c1_273 = arith.constant 1 : index
    %c0_274 = arith.constant 0 : index
    %c0_275 = arith.constant 0 : index
    %564 = vector.load %arg8[%c1_273, %c0_274, %c0_275] : memref<2x8x256xf32, #tpu.memory_space<vmem>>, vector<1x8x256xf32>
    %565 = vector.shape_cast %564 : vector<1x8x256xf32> to vector<8x256xf32>
    %566 = vector.shape_cast %563 : vector<8x256xf32> to vector<1x8x256xf32>
    tpu.vector_store %arg8[%c1_273, %c0_274, %c0_275], %566 {strides = array<i32>} : memref<2x8x256xf32, #tpu.memory_space<vmem>>, vector<1x8x256xf32>,
    return
  }
  func.func @transform_0(%arg0: i32) -> (i32, i32, i32) {
    %c0_i32 = arith.constant 0 : i32
    %c0_i32_0 = arith.constant 0 : i32
    %c0_i32_1 = arith.constant 0 : i32
    return %arg0, %c0_i32, %c0_i32_0 : i32, i32, i32
  }
  func.func @transform_1(%arg0: i32) -> (i32, i32, i32) {
    %c0_i32 = arith.constant 0 : i32
    %c0_i32_0 = arith.constant 0 : i32
    %c0_i32_1 = arith.constant 0 : i32
    %c0_i32_2 = arith.constant 0 : i32
    return %c0_i32, %c0_i32_0, %c0_i32_1 : i32, i32, i32
  }
  func.func @transform_2(%arg0: i32) -> i32 {
    %c0_i32 = arith.constant 0 : i32
    %c0_i32_0 = arith.constant 0 : i32
    return %c0_i32 : i32
  }
  func.func @transform_3(%arg0: i32) -> (i32, i32) {
    %c0_i32 = arith.constant 0 : i32
    %c0_i32_0 = arith.constant 0 : i32
    %c0_i32_1 = arith.constant 0 : i32
    return %c0_i32, %c0_i32_0 : i32, i32
  }
  func.func @transform_4(%arg0: i32) -> (i32, i32) {
    %c0_i32 = arith.constant 0 : i32
    %c0_i32_0 = arith.constant 0 : i32
    %c0_i32_1 = arith.constant 0 : i32
    return %c0_i32, %c0_i32_0 : i32, i32
  }
  func.func @transform_5(%arg0: i32) -> (i32, i32) {
    %c0_i32 = arith.constant 0 : i32
    %c0_i32_0 = arith.constant 0 : i32
    %c0_i32_1 = arith.constant 0 : i32
    return %c0_i32, %c0_i32_0 : i32, i32
  }
  func.func @transform_6(%arg0: i32) -> (i32, i32, i32) {
    %c0_i32 = arith.constant 0 : i32
    %c0_i32_0 = arith.constant 0 : i32
    %c0_i32_1 = arith.constant 0 : i32
    return %arg0, %c0_i32, %c0_i32_0 : i32, i32, i32
  }
  func.func @transform_7(%arg0: i32) -> (i32, i32, i32) {
    %c0_i32 = arith.constant 0 : i32
    %c0_i32_0 = arith.constant 0 : i32
    %c0_i32_1 = arith.constant 0 : i32
    return %arg0, %c0_i32, %c0_i32_0 : i32, i32, i32
  }
}

</mosaic_0001>

<llo_original>
// kernel: tpu_custom_call.1
$region0: #{tpu_custom_call.1}
  #allocation0 [shape = 'u32[]', space=smem, size = 0x4, offset = 0x4, fixed_abs, tag = 'smem constant byte address 0x4 - core index']
  #allocation1 [shape = 'u32[144,128]{1,0:T(1,128)}', space=vmem, size = 0x12000, scoped, tag = 'internal scratch']
  %s0 = inlined_call_operand.hbm [shape: f32[4,8,256], index: 0, kind: input, shape index: {}]
  %s1 = inlined_call_operand.vmem [shape: f32[2,8,1], index: 1, kind: input, shape index: {}]
  %s2 = inlined_call_operand.vmem [shape: f32[2], index: 2, kind: input, shape index: {}]
  %s3 = inlined_call_operand.vmem [shape: f32[8,2], index: 3, kind: input, shape index: {}]
  %s4 = inlined_call_operand.vmem [shape: f32[8,1], index: 4, kind: input, shape index: {}]
  %s5 = inlined_call_operand.vmem [shape: f32[2,27], index: 5, kind: input, shape index: {}]
  %s6 = inlined_call_operand.hbm [shape: f32[4,1,256], index: 6, kind: output, shape index: {0}]
  %s7 = inlined_call_operand.hbm [shape: f32[4,8,256], index: 7, kind: output, shape index: {1}]
  %8 = xla_tuple %s6, %s7
  %s9 = sld [smem:[#allocation0]]
  $region73: #{tpu_custom_call.1} parent=0
    _
  %s11 = ssub.s32 1, %s9
  %s12 = scalar_select 0, %s11, %s9
  $region1: #{tpu_custom_call.1} parent=0
    #allocation2 [shape = 'u8[32768]{0}', space=vmem, size = 0x8000, scoped, tag = 'input window, operand 0']
    #allocation3 [shape = 's32[2]{0}', space=sflag, size = 0x8, scoped, tag = 'scoped memory for tpu_custom_call.1']
    #allocation4 [shape = 's32[2]{0}', space=sflag, size = 0x8, scoped, tag = 'scoped memory for tpu_custom_call.1']
    #allocation5 [shape = 's32[2]{0}', space=sflag, size = 0x8, scoped, tag = 'scoped memory for tpu_custom_call.1']
    #allocation6 [shape = 'u8[512]{0}', space=smem, size = 0x200, scoped, tag = 'input window, operand 2, single buffered']
    #allocation7 [shape = 'u8[4096]{0}', space=vmem, size = 0x1000, scoped, tag = 'output window, operand 0']
    #allocation8 [shape = 'u8[32768]{0}', space=vmem, size = 0x8000, scoped, tag = 'output window, operand 1']
    #allocation9 [shape = 's32[2]{0}', space=sflag, size = 0x8, scoped, tag = 'scoped memory for tpu_custom_call.1']
    %13 = vsyncpa [#allocation3], 0
    %s14 = scalar_lea.sflag [#allocation3], 1
    %15 = vsyncpa %s14, 0
    %16 = vsyncpa [#allocation5], 0
    %17 = vsyncpa [#allocation4], 0
    %s18 = scalar_lea.sflag [#allocation4], 1
    %19 = vsyncpa %s18, 0
    %20 = vsyncpa [#allocation9], 0
    %s21 = scalar_lea.sflag [#allocation9], 1
    %22 = vsyncpa %s21, 0
    loop: start=0, step=1, limit=4
    $region2: #{tpu_custom_call.1} parent=1 // loop_pre_header
      _
    $region3: #{tpu_custom_call.1} parent=1 // loop_header
      %s24 = sphi 0, %s28
      %p25 = scmp.ge.s32.totalorder %s24, 4
      %s34 = sphi 0, %s36
      %s37 = sphi 0, %s34
      %s38 = sphi 0, %s37
      %s54 = sphi 0, %s38
      %s58 = sphi 0, %s58
      %s60 = sphi 0, %s58
      %s61 = sphi 0, %s60
      %s75 = sphi 0, %s61
      %s79 = sphi 0, %s79
      %s81 = sphi 0, %s79
      %s82 = sphi 0, %s81
      %s96 = sphi 0, %s82
      %s100 = sphi 0, %s100
      %s102 = sphi 0, %s100
      %s103 = sphi 0, %s102
      %s117 = sphi 0, %s103
      %s121 = sphi 0, %s121
      %s123 = sphi 0, %s121
      %s124 = sphi 0, %s123
      %s138 = sphi 0, %s124
      %s142 = sphi 0, %s142
      %s144 = sphi 0, %s142
      %s145 = sphi 0, %s144
      %s159 = sphi 0, %s145
      %s165 = sphi 0, %s167
      %s168 = sphi 0, %s165
      %s169 = sphi 0, %s168
      %s185 = sphi 0, %s169
      %s191 = sphi 0, %s193
      %s194 = sphi 0, %s191
      %s195 = sphi 0, %s194
      %s211 = sphi 0, %s195
    $region4: #{tpu_custom_call.1} parent=1 // loop_header_branch
      %27 = sbr.rel (%p25) target = $region8
    $region5: #{tpu_custom_call.1} parent=1 // loop_body
      %s29 = ssub.s32 %s24, 1
      %s30 = ssub.s32 %s24, 2
      %s31 = sadd.s32 %s24, 1
      %s32 = ssub.s32 %s24, %s31
      %p33 = scmp.eq.s32.totalorder %s32, 0
      %s35 = sadd.s32 %s34, 1
      %s36 = scalar_select %p33, %s34, %s35
      %p39 = pneg %p33
      %p40 = scmp.eq.s32.totalorder %s24, 1
      %p41 = por %p39, %p40
      %p42 = scmp.ne.s32.totalorder %s34, %s37
      %p43 = scmp.eq.s32.totalorder %s24, 0
      %p44 = por %p42, %p43
      %p45 = scmp.ne.s32.totalorder %s34, %s37
      %p46 = scmp.eq.s32.totalorder %s29, 1
      %p47 = por %p45, %p46
      %p48 = scmp.ne.s32.totalorder %s37, %s38
      %p49 = scmp.eq.s32.totalorder %s29, 0
      %p50 = por %p48, %p49
      %p51 = scmp.ne.s32.totalorder %s37, %s38
      %p52 = scmp.eq.s32.totalorder %s30, 1
      %p53 = por %p51, %p52
      %p55 = scmp.ne.s32.totalorder %s38, %s54
      %p56 = scmp.eq.s32.totalorder %s30, 0
      %p57 = por %p55, %p56
      %s59 = sadd.s32 %s58, 1
      %p62 = scmp.eq.s32.totalorder %s24, 1
      %p63 = scmp.ne.s32.totalorder %s58, %s60
      %p64 = scmp.eq.s32.totalorder %s24, 0
      %p65 = por %p63, %p64
      %p66 = scmp.ne.s32.totalorder %s58, %s60
      %p67 = scmp.eq.s32.totalorder %s29, 1
      %p68 = por %p66, %p67
      %p69 = scmp.ne.s32.totalorder %s60, %s61
      %p70 = scmp.eq.s32.totalorder %s29, 0
      %p71 = por %p69, %p70
      %p72 = scmp.ne.s32.totalorder %s60, %s61
      %p73 = scmp.eq.s32.totalorder %s30, 1
      %p74 = por %p72, %p73
      %p76 = scmp.ne.s32.totalorder %s61, %s75
      %p77 = scmp.eq.s32.totalorder %s30, 0
      %p78 = por %p76, %p77
      %s80 = sadd.s32 %s79, 1
      %p83 = scmp.eq.s32.totalorder %s24, 1
      %p84 = scmp.ne.s32.totalorder %s79, %s81
      %p85 = scmp.eq.s32.totalorder %s24, 0
      %p86 = por %p84, %p85
      %p87 = scmp.ne.s32.totalorder %s79, %s81
      %p88 = scmp.eq.s32.totalorder %s29, 1
      %p89 = por %p87, %p88
      %p90 = scmp.ne.s32.totalorder %s81, %s82
      %p91 = scmp.eq.s32.totalorder %s29, 0
      %p92 = por %p90, %p91
      %p93 = scmp.ne.s32.totalorder %s81, %s82
      %p94 = scmp.eq.s32.totalorder %s30, 1
      %p95 = por %p93, %p94
      %p97 = scmp.ne.s32.totalorder %s82, %s96
      %p98 = scmp.eq.s32.totalorder %s30, 0
      %p99 = por %p97, %p98
      %s101 = sadd.s32 %s100, 1
      %p104 = scmp.eq.s32.totalorder %s24, 1
      %p105 = scmp.ne.s32.totalorder %s100, %s102
      %p106 = scmp.eq.s32.totalorder %s24, 0
      %p107 = por %p105, %p106
      %p108 = scmp.ne.s32.totalorder %s100, %s102
      %p109 = scmp.eq.s32.totalorder %s29, 1
      %p110 = por %p108, %p109
      %p111 = scmp.ne.s32.totalorder %s102, %s103
      %p112 = scmp.eq.s32.totalorder %s29, 0
      %p113 = por %p111, %p112
      %p114 = scmp.ne.s32.totalorder %s102, %s103
      %p115 = scmp.eq.s32.totalorder %s30, 1
      %p116 = por %p114, %p115
      %p118 = scmp.ne.s32.totalorder %s103, %s117
      %p119 = scmp.eq.s32.totalorder %s30, 0
      %p120 = por %p118, %p119
      %s122 = sadd.s32 %s121, 1
      %p125 = scmp.eq.s32.totalorder %s24, 1
      %p126 = scmp.ne.s32.totalorder %s121, %s123
      %p127 = scmp.eq.s32.totalorder %s24, 0
      %p128 = por %p126, %p127
      %p129 = scmp.ne.s32.totalorder %s121, %s123
      %p130 = scmp.eq.s32.totalorder %s29, 1
      %p131 = por %p129, %p130
      %p132 = scmp.ne.s32.totalorder %s123, %s124
      %p133 = scmp.eq.s32.totalorder %s29, 0
      %p134 = por %p132, %p133
      %p135 = scmp.ne.s32.totalorder %s123, %s124
      %p136 = scmp.eq.s32.totalorder %s30, 1
      %p137 = por %p135, %p136
      %p139 = scmp.ne.s32.totalorder %s124, %s138
      %p140 = scmp.eq.s32.totalorder %s30, 0
      %p141 = por %p139, %p140
      %s143 = sadd.s32 %s142, 1
      %p146 = scmp.eq.s32.totalorder %s24, 1
      %p147 = scmp.ne.s32.totalorder %s142, %s144
      %p148 = scmp.eq.s32.totalorder %s24, 0
      %p149 = por %p147, %p148
      %p150 = scmp.ne.s32.totalorder %s142, %s144
      %p151 = scmp.eq.s32.totalorder %s29, 1
      %p152 = por %p150, %p151
      %p153 = scmp.ne.s32.totalorder %s144, %s145
      %p154 = scmp.eq.s32.totalorder %s29, 0
      %p155 = por %p153, %p154
      %p156 = scmp.ne.s32.totalorder %s144, %s145
      %p157 = scmp.eq.s32.totalorder %s30, 1
      %p158 = por %p156, %p157
      %p160 = scmp.ne.s32.totalorder %s145, %s159
      %p161 = scmp.eq.s32.totalorder %s30, 0
      %p162 = por %p160, %p161
      %s163 = ssub.s32 %s24, %s31
      %p164 = scmp.eq.s32.totalorder %s163, 0
      %s166 = sadd.s32 %s165, 1
      %s167 = scalar_select %p164, %s165, %s166
      %p170 = pneg %p164
      %p171 = scmp.eq.s32.totalorder %s24, 1
      %p172 = por %p170, %p171
      %p173 = scmp.ne.s32.totalorder %s165, %s168
      %p174 = scmp.eq.s32.totalorder %s24, 0
      %p175 = por %p173, %p174
      %p176 = scmp.ne.s32.totalorder %s165, %s168
      %p177 = scmp.eq.s32.totalorder %s29, 1
      %p178 = por %p176, %p177
      %p179 = scmp.ne.s32.totalorder %s168, %s169
      %p180 = scmp.eq.s32.totalorder %s29, 0
      %p181 = por %p179, %p180
      %p182 = scmp.ne.s32.totalorder %s168, %s169
      %p183 = scmp.eq.s32.totalorder %s30, 1
      %p184 = por %p182, %p183
      %p186 = scmp.ne.s32.totalorder %s169, %s185
      %p187 = scmp.eq.s32.totalorder %s30, 0
      %p188 = por %p186, %p187
      %s189 = ssub.s32 %s24, %s31
      %p190 = scmp.eq.s32.totalorder %s189, 0
      %s192 = sadd.s32 %s191, 1
      %s193 = scalar_select %p190, %s191, %s192
      %p196 = pneg %p190
      %p197 = scmp.eq.s32.totalorder %s24, 1
      %p198 = por %p196, %p197
      %p199 = scmp.ne.s32.totalorder %s191, %s194
      %p200 = scmp.eq.s32.totalorder %s24, 0
      %p201 = por %p199, %p200
      %p202 = scmp.ne.s32.totalorder %s191, %s194
      %p203 = scmp.eq.s32.totalorder %s29, 1
      %p204 = por %p202, %p203
      %p205 = scmp.ne.s32.totalorder %s194, %s195
      %p206 = scmp.eq.s32.totalorder %s29, 0
      %p207 = por %p205, %p206
      %p208 = scmp.ne.s32.totalorder %s194, %s195
      %p209 = scmp.eq.s32.totalorder %s30, 1
      %p210 = por %p208, %p209
      %p212 = scmp.ne.s32.totalorder %s195, %s211
      %p213 = scmp.eq.s32.totalorder %s30, 0
      %p214 = por %p212, %p213
      %p215 = scmp.le.s32.totalorder 1, %s24
      %p216 = scmp.lt.s32.totalorder %s24, 3
      %p217 = pnand %p215, %p216
      %p218 = pneg %p217
      // Predicated region
      $region9: #{tpu_custom_call.1} parent=5 // pred_check
        _
      $region10: #{tpu_custom_call.1} parent=5 // pred_check_branch
        %220 = sbr.rel (%p217) target = $region12
      $region11: #{tpu_custom_call.1} parent=5 // pred_region
        %s221 = ssub.s32 %s24, 1
        // Predicated region
        $region13: #{tpu_custom_call.1} parent=11 // pred_check
          %p222 = pneg %p71
        $region14: #{tpu_custom_call.1} parent=11 // pred_check_branch
          %224 = sbr.rel (%p222) target = $region16
        $region15: #{tpu_custom_call.1} parent=11 // pred_region
          _
        $region16: #{tpu_custom_call.1} parent=11 // pred_fallthru
          _
        // Predicated region
        $region17: #{tpu_custom_call.1} parent=11 // pred_check
          %p225 = pneg %p92
        $region18: #{tpu_custom_call.1} parent=11 // pred_check_branch
          %227 = sbr.rel (%p225) target = $region20
        $region19: #{tpu_custom_call.1} parent=11 // pred_region
          %s229 = ssub.s32 16, 16
          %230 = vsyncadd [#allocation5], %s229
          %s232 = sshll.u32 %s2, 4
          %s233 = int_to_ptr.vmem [resolvable:$true] %s232
          %235 = dma.vmem_to_smem %s233, 16, [#allocation6], [#allocation5]
        $region20: #{tpu_custom_call.1} parent=11 // pred_fallthru
          _
        // Predicated region
        $region21: #{tpu_custom_call.1} parent=11 // pred_check
          %p236 = pneg %p113
        $region22: #{tpu_custom_call.1} parent=11 // pred_check_branch
          %238 = sbr.rel (%p236) target = $region24
        $region23: #{tpu_custom_call.1} parent=11 // pred_region
          _
        $region24: #{tpu_custom_call.1} parent=11 // pred_fallthru
          _
        // Predicated region
        $region25: #{tpu_custom_call.1} parent=11 // pred_check
          %p239 = pneg %p134
        $region26: #{tpu_custom_call.1} parent=11 // pred_check_branch
          %241 = sbr.rel (%p239) target = $region28
        $region27: #{tpu_custom_call.1} parent=11 // pred_region
          _
        $region28: #{tpu_custom_call.1} parent=11 // pred_fallthru
          _
        // Predicated region
        $region29: #{tpu_custom_call.1} parent=11 // pred_check
          %p242 = pneg %p155
        $region30: #{tpu_custom_call.1} parent=11 // pred_check_branch
          %244 = sbr.rel (%p242) target = $region32
        $region31: #{tpu_custom_call.1} parent=11 // pred_region
          _
        $region32: #{tpu_custom_call.1} parent=11 // pred_fallthru
          _
      $region12: #{tpu_custom_call.1} parent=5 // pred_fallthru
        _
      %p245 = scmp.lt.s32.totalorder %s24, 2
      // Predicated region
      $region33: #{tpu_custom_call.1} parent=5 // pred_check
        %p246 = pneg %p245
      $region34: #{tpu_custom_call.1} parent=5 // pred_check_branch
        %248 = sbr.rel (%p246) target = $region36
      $region35: #{tpu_custom_call.1} parent=5 // pred_region
        // Predicated region
        $region37: #{tpu_custom_call.1} parent=35 // pred_check
          %p249 = pneg %p44
        $region38: #{tpu_custom_call.1} parent=35 // pred_check_branch
          %251 = sbr.rel (%p249) target = $region40
        $region39: #{tpu_custom_call.1} parent=35 // pred_region
          %s252 = sand.u32 %s34, 1
          %s253 = scalar_lea.sflag [#allocation3], %s252
          %s254 = sand.u32 %s34, 1
          %s255 = smul.addr %s254, 32
          %s256 = scalar_lea.vmem [#allocation2], %s255
          %s257 = smul.u32 2, %s24
          %s259 = ssub.s32 512, 512
          %260 = vsyncadd %s253, %s259
          %s261 = smul.addr %s257, 2
          %s262 = smul.addr %s261, 128
          %s263 = scalar_lea.hbm %s0, %s262
          %s264 = sshll.u32 %s256, 4
          %s265 = int_to_ptr.vmem [resolvable:$true] %s264
          %270 = dma.hbm_to_vmem [thread:$0]  %s263, 512, %s265, %s253, 256, 256, 16
        $region40: #{tpu_custom_call.1} parent=35 // pred_fallthru
          _
      $region36: #{tpu_custom_call.1} parent=5 // pred_fallthru
        _
      %p271 = scmp.le.s32.totalorder 1, %s24
      %p272 = scmp.lt.s32.totalorder %s24, 3
      %p273 = pnand %p271, %p272
      %p274 = pneg %p273
      // Predicated region
      $region41: #{tpu_custom_call.1} parent=5 // pred_check
        _
      $region42: #{tpu_custom_call.1} parent=5 // pred_check_branch
        %276 = sbr.rel (%p273) target = $region44
      $region43: #{tpu_custom_call.1} parent=5 // pred_region
        %s277 = ssub.s32 %s24, 1
        %s278 = sand.u32 %s37, 1
        %s279 = scalar_lea.sflag [#allocation3], %s278
        %s280 = sand.u32 %s37, 1
        %s281 = smul.addr %s280, 32
        %s282 = scalar_lea.vmem [#allocation2], %s281
        // Predicated region
        $region45: #{tpu_custom_call.1} parent=43 // pred_check
          %p283 = pneg %p50
        $region46: #{tpu_custom_call.1} parent=43 // pred_check_branch
          %285 = sbr.rel (%p283) target = $region48
        $region47: #{tpu_custom_call.1} parent=43 // pred_region
          %286 = dma.done %s279, 512
        $region48: #{tpu_custom_call.1} parent=43 // pred_fallthru
          _
        // Predicated region
        $region49: #{tpu_custom_call.1} parent=43 // pred_check
          %p287 = pneg %p92
        $region50: #{tpu_custom_call.1} parent=43 // pred_check_branch
          %289 = sbr.rel (%p287) target = $region52
        $region51: #{tpu_custom_call.1} parent=43 // pred_region
          %290 = dma.done [#allocation5], 16
        $region52: #{tpu_custom_call.1} parent=43 // pred_fallthru
          _
        %291 = sfence
        %s292 = sand.u32 %s37, 1
        %s293 = scalar_lea.sflag [#allocation3], %s292
        %s294 = sand.u32 %s37, 1
        %s295 = smul.addr %s294, 32
        %s296 = scalar_lea.vmem [#allocation2], %s295
        %p297 = pneg %p50
        %p298 = pneg %p47
        %p299 = pneg %p71
        %p300 = pneg %p68
        %p301 = pneg %p92
        %p302 = pneg %p89
        %p303 = pneg %p113
        %p304 = pneg %p110
        %p305 = pneg %p134
        %p306 = pneg %p131
        %p307 = pneg %p155
        %p308 = pneg %p152
        %p309 = pneg %p181
        %p310 = pneg %p178
        %s311 = sand.u32 %s168, 1
        %s312 = scalar_lea.sflag [#allocation4], %s311
        %s313 = sand.u32 %s168, 1
        %s314 = smul.addr %s313, 4
        %s315 = scalar_lea.vmem [#allocation7], %s314
        %p316 = pneg %p207
        %p317 = pneg %p204
        %s318 = sand.u32 %s194, 1
        %s319 = scalar_lea.sflag [#allocation9], %s318
        %s320 = sand.u32 %s194, 1
        %s321 = smul.addr %s320, 32
        %s322 = scalar_lea.vmem [#allocation8], %s321
        %s323 = smul.u32 2, %s29
        %s324 = smul.u32 2, %s29
        %s325 = smul.u32 2, %s29
        %v326 = vlaneseq
        %v327 = vand.u32 %v326, 127
        %v328 = vadd.s32 %v327, 128
        %v329 = vshra.s32 %v327, 6
        %v330 = vshra.s32 %v328, 6
        %v331 = vshra.s32 %v327, 3
        %v332 = vshra.s32 %v328, 3
        %v333 = vand.u32 %v331, 7
        %v334 = vand.u32 %v332, 7
        %v335 = vand.u32 %v327, 7
        %v336 = vand.u32 %v328, 7
        %vm337 = vcmp.ge.s32.totalorder %v329, 1
        %vm338 = vcmp.ge.s32.totalorder %v330, 1
        %vm339 = vcmp.le.s32.totalorder %v329, 2
        %vm340 = vcmp.le.s32.totalorder %v330, 2
        %vm341 = vcmp.ge.s32.totalorder %v333, 1
        %vm342 = vcmp.ge.s32.totalorder %v334, 1
        %vm343 = vcmp.le.s32.totalorder %v333, 6
        %vm344 = vcmp.le.s32.totalorder %v334, 6
        %vm345 = vcmp.ge.s32.totalorder %v335, 1
        %vm346 = vcmp.ge.s32.totalorder %v336, 1
        %vm347 = vcmp.le.s32.totalorder %v335, 6
        %vm348 = vcmp.le.s32.totalorder %v336, 6
        %v349 = vld [vmem:[%s282] sm:$0xff]
        %v350 = vld [vmem:[%s282 + $0x8] sm:$0xff]
        %v351 = vadd.f32 %v349, %v350
        %352 = vadd.xlane.f32.xlu0 %v351
        %v353 = vpop.xlane.xlu0 %352
        %v354 = vrcp.pop 256.0
        %v355 = vmul.f32 %v353, %v354
        %v356 = vmax.f32 %v349, %v350
        %357 = vmax.xlane.f32.xlu0 %v356
        %v358 = vpop.xlane.xlu0 %357
        %vm359 = vcmask 7168
        %v360 = vsel %vm359, %v355, %v358
        %v361 = vld [vmem:[%s1] sm:$0xff]
        %363 = vset.pattern.permute.xlu0 0
        %364 = vperm.xlu0 %363, %v361
        %v365 = vpop.permute.xlu0 %364
        %v367 = vmul.f32 %v365, %v360
        %vm368 = vcmask 15360
        %v369 = vsel %vm368, %v367, 0.0
        %v370 = vrot.slane %v369, 4
        %v371 = vadd.f32 %v369, %v370
        %v372 = vrot.slane %v371, 2
        %v373 = vadd.f32 %v371, %v372
        %v374 = vrot.slane %v373, 1
        %v375 = vadd.f32 %v373, %v374
        %s376 = sld [smem:[#allocation6]]
        %v377 = vstv %s376
        %v378 = vadd.f32 %v375, %v377
        %v379 = vmax.f32 %v378, 0.0
        %s380 = scalar_lea.vmem %s1, 8
        %v381 = vld [vmem:[%s380] sm:$0xff]
        %383 = vset.pattern.permute.xlu0 0
        %384 = vperm.xlu0 %383, %v381
        %v385 = vpop.permute.xlu0 %384
        %v387 = vmul.f32 %v385, %v360
        %v388 = vsel %vm368, %v387, 0.0
        %v389 = vrot.slane %v388, 4
        %v390 = vadd.f32 %v388, %v389
        %v391 = vrot.slane %v390, 2
        %v392 = vadd.f32 %v390, %v391
        %v393 = vrot.slane %v392, 1
        %v394 = vadd.f32 %v392, %v393
        %s395 = sld [smem:[#allocation6 + $0x1]]
        %v396 = vstv %s395
        %v397 = vadd.f32 %v394, %v396
        %v398 = vmax.f32 %v397, 0.0
        %v399 = vld [vmem:[%s3] sm:$0xff]
        %401 = vset.pattern.permute.xlu0 0
        %402 = vperm.xlu0 %401, %v399
        %v403 = vpop.permute.xlu0 %402
        %v405 = vmul.f32 %v403, %v379
        %406 = vset.pattern.permute.xlu0 1
        %407 = vperm.xlu0 %406, %v399
        %v408 = vpop.permute.xlu0 %407
        %v410 = vmul.f32 %v408, %v398
        %v411 = vadd.f32 %v405, %v410
        %v412 = vld [vmem:[%s4] sm:$0xff]
        %414 = vset.pattern.permute.xlu0 0
        %415 = vperm.xlu0 %414, %v412
        %v416 = vpop.permute.xlu0 %415
        %v418 = vadd.f32 %v411, %v416
        %420 = vrot.lane.b32.xlu0 %v418, 127
        %v421 = vpop.permute.xlu0 %420
        %v423 = vadd.f32 %v418, %v421
        %v424 = vxor.u32 %v423, 2147483648
        %v425 = vmul.f32 %v424, 1.442695
        %v426 = vpow.pop %v425
        %v427 = vadd.f32 %v426, 1.0
        %v428 = vrcp.pop %v427
        %v429 = vmul.f32 1.0, %v428
        %431 = vset.pattern.permute.xlu0 0
        %432 = vperm.xlu0 %431, %v429
        %v433 = vpop.permute.xlu0 %432
        %v435 = vmul.f32 %v349, %v433
        %v436 = vmul.f32 %v350, %v433
        %v437 = vrot.slane %v435, 4
        %v438 = vadd.f32 %v435, %v437
        %v439 = vrot.slane %v438, 2
        %v440 = vadd.f32 %v438, %v439
        %v441 = vrot.slane %v440, 1
        %v442 = vadd.f32 %v440, %v441
        %v443 = vrot.slane %v436, 4
        %v444 = vadd.f32 %v436, %v443
        %v445 = vrot.slane %v444, 2
        %v446 = vadd.f32 %v444, %v445
        %v447 = vrot.slane %v446, 1
        %v448 = vadd.f32 %v446, %v447
        %v449 = vrcp.pop 8.0
        %v450 = vmul.f32 %v442, %v449
        %v451 = vmul.f32 %v448, %v449
        %v452 = vrot.slane %v435, 4
        %v453 = vmax.f32 %v435, %v452
        %v454 = vrot.slane %v453, 2
        %v455 = vmax.f32 %v453, %v454
        %v456 = vrot.slane %v455, 1
        %v457 = vmax.f32 %v455, %v456
        %v458 = vrot.slane %v436, 4
        %v459 = vmax.f32 %v436, %v458
        %v460 = vrot.slane %v459, 2
        %v461 = vmax.f32 %v459, %v460
        %v462 = vrot.slane %v461, 1
        %v463 = vmax.f32 %v461, %v462
        %vm464 = vcmask 1040384
        %v465 = vsel %vm464, %v450, %v457
        %v466 = vsel %vm464, %v451, %v463
        %467 = vst [vmem:[%s322] sm:$0xff] %v435
        %468 = vst [vmem:[%s322 + $0x8] sm:$0xff] %v436
        %469 = vrot.lane.b32.xlu0 %v465, 64
        %v470 = vpop.permute.xlu0 %469
        %471 = vrot.lane.b32.xlu0 %v466, 64
        %v472 = vpop.permute.xlu0 %471
        %vm473 = vcmp.lt.s32.totalorder %v327, 64
        %v474 = vsel %vm473, %v470, %v472
        %v475 = vsel %vm473, %v472, %v470
        %v476 = vsel %vm337, %v475, 0.0
        %v477 = vsel %vm338, %v474, 0.0
        %478 = vrot.lane.b32.xlu0 %v476, 8
        %v479 = vpop.permute.xlu0 %478
        %480 = vrot.lane.b32.xlu0 %v477, 8
        %v481 = vpop.permute.xlu0 %480
        %vm482 = vcmp.lt.s32.totalorder %v327, 8
        %v483 = vsel %vm482, %v479, %v481
        %v484 = vsel %vm482, %v481, %v479
        %v485 = vsel %vm341, %v484, 0.0
        %v486 = vsel %vm342, %v483, 0.0
        %487 = vrot.lane.b32.xlu0 %v485, 1
        %v488 = vpop.permute.xlu0 %487
        %489 = vrot.lane.b32.xlu0 %v486, 1
        %v490 = vpop.permute.xlu0 %489
        %vm491 = vcmp.lt.s32.totalorder %v327, 1
        %v492 = vsel %vm491, %v488, %v490
        %v493 = vsel %vm491, %v490, %v488
        %v494 = vsel %vm345, %v493, 0.0
        %v495 = vsel %vm346, %v492, 0.0
        %v496 = vld [vmem:[%s5] sm:$0x3]
        %498 = vset.pattern.permute.xlu0 0
        %499 = vperm.xlu0 %498, %v496
        %v500 = vpop.permute.xlu0 %499
        %v502 = vmul.f32 %v500, %v494
        %v503 = vmul.f32 %v500, %v495
        %v504 = vadd.f32 %v502, 0.0
        %v505 = vadd.f32 %v503, 0.0
        %506 = vset.pattern.permute.xlu0 1
        %507 = vperm.xlu0 %506, %v496
        %v508 = vpop.permute.xlu0 %507
        %v510 = vmul.f32 %v508, %v485
        %v511 = vmul.f32 %v508, %v486
        %v512 = vadd.f32 %v510, 0.0
        %v513 = vadd.f32 %v511, 0.0
        %514 = vrot.lane.b32.xlu0 %v485, 127
        %v515 = vpop.permute.xlu0 %514
        %516 = vrot.lane.b32.xlu0 %v486, 127
        %v517 = vpop.permute.xlu0 %516
        %vm518 = vcmp.lt.s32.totalorder %v327, 127
        %v519 = vsel %vm518, %v515, %v517
        %v520 = vsel %vm518, %v517, %v515
        %v521 = vsel %vm347, %v519, 0.0
        %v522 = vsel %vm348, %v520, 0.0
        %523 = vset.pattern.permute.xlu0 2
        %524 = vperm.xlu0 %523, %v496
        %v525 = vpop.permute.xlu0 %524
        %v527 = vmul.f32 %v525, %v521
        %v528 = vmul.f32 %v525, %v522
        %v529 = vadd.f32 %v527, 0.0
        %v530 = vadd.f32 %v528, 0.0
        %531 = vrot.lane.b32.xlu0 %v476, 1
        %v532 = vpop.permute.xlu0 %531
        %533 = vrot.lane.b32.xlu0 %v477, 1
        %v534 = vpop.permute.xlu0 %533
        %v535 = vsel %vm491, %v532, %v534
        %v536 = vsel %vm491, %v534, %v532
        %v537 = vsel %vm345, %v536, 0.0
        %v538 = vsel %vm346, %v535, 0.0
        %539 = vset.pattern.permute.xlu0 3
        %540 = vperm.xlu0 %539, %v496
        %v541 = vpop.permute.xlu0 %540
        %v543 = vmul.f32 %v541, %v537
        %v544 = vmul.f32 %v541, %v538
        %v545 = vadd.f32 %v543, 0.0
        %v546 = vadd.f32 %v544, 0.0
        %547 = vset.pattern.permute.xlu0 4
        %548 = vperm.xlu0 %547, %v496
        %v549 = vpop.permute.xlu0 %548
        %v551 = vmul.f32 %v549, %v476
        %v552 = vmul.f32 %v549, %v477
        %v553 = vadd.f32 %v504, %v551
        %v554 = vadd.f32 %v505, %v552
        %555 = vrot.lane.b32.xlu0 %v476, 127
        %v556 = vpop.permute.xlu0 %555
        %557 = vrot.lane.b32.xlu0 %v477, 127
        %v558 = vpop.permute.xlu0 %557
        %v559 = vsel %vm518, %v556, %v558
        %v560 = vsel %vm518, %v558, %v556
        %v561 = vsel %vm347, %v559, 0.0
        %v562 = vsel %vm348, %v560, 0.0
        %563 = vset.pattern.permute.xlu0 5
        %564 = vperm.xlu0 %563, %v496
        %v565 = vpop.permute.xlu0 %564
        %v567 = vmul.f32 %v565, %v561
        %v568 = vmul.f32 %v565, %v562
        %v569 = vadd.f32 %v512, %v567
        %v570 = vadd.f32 %v513, %v568
        %571 = vrot.lane.b32.xlu0 %v476, 120
        %v572 = vpop.permute.xlu0 %571
        %573 = vrot.lane.b32.xlu0 %v477, 120
        %v574 = vpop.permute.xlu0 %573
        %vm575 = vcmp.lt.s32.totalorder %v327, 120
        %v576 = vsel %vm575, %v572, %v574
        %v577 = vsel %vm575, %v574, %v572
        %v578 = vsel %vm343, %v576, 0.0
        %v579 = vsel %vm344, %v577, 0.0
        %580 = vrot.lane.b32.xlu0 %v578, 1
        %v581 = vpop.permute.xlu0 %580
        %582 = vrot.lane.b32.xlu0 %v579, 1
        %v583 = vpop.permute.xlu0 %582
        %v584 = vsel %vm491, %v581, %v583
        %v585 = vsel %vm491, %v583, %v581
        %v586 = vsel %vm345, %v585, 0.0
        %v587 = vsel %vm346, %v584, 0.0
        %588 = vset.pattern.permute.xlu0 6
        %589 = vperm.xlu0 %588, %v496
        %v590 = vpop.permute.xlu0 %589
        %v592 = vmul.f32 %v590, %v586
        %v593 = vmul.f32 %v590, %v587
        %v594 = vadd.f32 %v529, %v592
        %v595 = vadd.f32 %v530, %v593
        %596 = vset.pattern.permute.xlu0 7
        %597 = vperm.xlu0 %596, %v496
        %v598 = vpop.permute.xlu0 %597
        %v600 = vmul.f32 %v598, %v578
        %v601 = vmul.f32 %v598, %v579
        %v602 = vadd.f32 %v545, %v600
        %v603 = vadd.f32 %v546, %v601
        %604 = vrot.lane.b32.xlu0 %v578, 127
        %v605 = vpop.permute.xlu0 %604
        %606 = vrot.lane.b32.xlu0 %v579, 127
        %v607 = vpop.permute.xlu0 %606
        %v608 = vsel %vm518, %v605, %v607
        %v609 = vsel %vm518, %v607, %v605
        %v610 = vsel %vm347, %v608, 0.0
        %v611 = vsel %vm348, %v609, 0.0
        %612 = vset.pattern.permute.xlu0 8
        %613 = vperm.xlu0 %612, %v496
        %v614 = vpop.permute.xlu0 %613
        %v616 = vmul.f32 %v614, %v610
        %v617 = vmul.f32 %v614, %v611
        %v618 = vadd.f32 %v553, %v616
        %v619 = vadd.f32 %v554, %v617
        %620 = vrot.lane.b32.xlu0 %v465, 8
        %v621 = vpop.permute.xlu0 %620
        %622 = vrot.lane.b32.xlu0 %v466, 8
        %v623 = vpop.permute.xlu0 %622
        %v624 = vsel %vm482, %v621, %v623
        %v625 = vsel %vm482, %v623, %v621
        %v626 = vsel %vm341, %v625, 0.0
        %v627 = vsel %vm342, %v624, 0.0
        %628 = vrot.lane.b32.xlu0 %v626, 1
        %v629 = vpop.permute.xlu0 %628
        %630 = vrot.lane.b32.xlu0 %v627, 1
        %v631 = vpop.permute.xlu0 %630
        %v632 = vsel %vm491, %v629, %v631
        %v633 = vsel %vm491, %v631, %v629
        %v634 = vsel %vm345, %v633, 0.0
        %v635 = vsel %vm346, %v632, 0.0
        %636 = vset.pattern.permute.xlu0 9
        %637 = vperm.xlu0 %636, %v496
        %v638 = vpop.permute.xlu0 %637
        %v640 = vmul.f32 %v638, %v634
        %v641 = vmul.f32 %v638, %v635
        %v642 = vadd.f32 %v569, %v640
        %v643 = vadd.f32 %v570, %v641
        %644 = vset.pattern.permute.xlu0 10
        %645 = vperm.xlu0 %644, %v496
        %v646 = vpop.permute.xlu0 %645
        %v648 = vmul.f32 %v646, %v626
        %v649 = vmul.f32 %v646, %v627
        %v650 = vadd.f32 %v594, %v648
        %v651 = vadd.f32 %v595, %v649
        %652 = vrot.lane.b32.xlu0 %v626, 127
        %v653 = vpop.permute.xlu0 %652
        %654 = vrot.lane.b32.xlu0 %v627, 127
        %v655 = vpop.permute.xlu0 %654
        %v656 = vsel %vm518, %v653, %v655
        %v657 = vsel %vm518, %v655, %v653
        %v658 = vsel %vm347, %v656, 0.0
        %v659 = vsel %vm348, %v657, 0.0
        %660 = vset.pattern.permute.xlu0 11
        %661 = vperm.xlu0 %660, %v496
        %v662 = vpop.permute.xlu0 %661
        %v664 = vmul.f32 %v662, %v658
        %v665 = vmul.f32 %v662, %v659
        %v666 = vadd.f32 %v602, %v664
        %v667 = vadd.f32 %v603, %v665
        %668 = vrot.lane.b32.xlu0 %v465, 1
        %v669 = vpop.permute.xlu0 %668
        %670 = vrot.lane.b32.xlu0 %v466, 1
        %v671 = vpop.permute.xlu0 %670
        %v672 = vsel %vm491, %v669, %v671
        %v673 = vsel %vm491, %v671, %v669
        %v674 = vsel %vm345, %v673, 0.0
        %v675 = vsel %vm346, %v672, 0.0
        %676 = vset.pattern.permute.xlu0 12
        %677 = vperm.xlu0 %676, %v496
        %v678 = vpop.permute.xlu0 %677
        %v680 = vmul.f32 %v678, %v674
        %v681 = vmul.f32 %v678, %v675
        %v682 = vadd.f32 %v618, %v680
        %v683 = vadd.f32 %v619, %v681
        %684 = vset.pattern.permute.xlu0 13
        %685 = vperm.xlu0 %684, %v496
        %v686 = vpop.permute.xlu0 %685
        %v688 = vmul.f32 %v686, %v465
        %v689 = vmul.f32 %v686, %v466
        %v690 = vadd.f32 %v642, %v688
        %v691 = vadd.f32 %v643, %v689
        %692 = vrot.lane.b32.xlu0 %v465, 127
        %v693 = vpop.permute.xlu0 %692
        %694 = vrot.lane.b32.xlu0 %v466, 127
        %v695 = vpop.permute.xlu0 %694
        %v696 = vsel %vm518, %v693, %v695
        %v697 = vsel %vm518, %v695, %v693
        %v698 = vsel %vm347, %v696, 0.0
        %v699 = vsel %vm348, %v697, 0.0
        %700 = vset.pattern.permute.xlu0 14
        %701 = vperm.xlu0 %700, %v496
        %v702 = vpop.permute.xlu0 %701
        %v704 = vmul.f32 %v702, %v698
        %v705 = vmul.f32 %v702, %v699
        %v706 = vadd.f32 %v650, %v704
        %v707 = vadd.f32 %v651, %v705
        %708 = vrot.lane.b32.xlu0 %v465, 120
        %v709 = vpop.permute.xlu0 %708
        %710 = vrot.lane.b32.xlu0 %v466, 120
        %v711 = vpop.permute.xlu0 %710
        %v712 = vsel %vm575, %v709, %v711
        %v713 = vsel %vm575, %v711, %v709
        %v714 = vsel %vm343, %v712, 0.0
        %v715 = vsel %vm344, %v713, 0.0
        %716 = vrot.lane.b32.xlu0 %v714, 1
        %v717 = vpop.permute.xlu0 %716
        %718 = vrot.lane.b32.xlu0 %v715, 1
        %v719 = vpop.permute.xlu0 %718
        %v720 = vsel %vm491, %v717, %v719
        %v721 = vsel %vm491, %v719, %v717
        %v722 = vsel %vm345, %v721, 0.0
        %v723 = vsel %vm346, %v720, 0.0
        %724 = vset.pattern.permute.xlu0 15
        %725 = vperm.xlu0 %724, %v496
        %v726 = vpop.permute.xlu0 %725
        %v728 = vmul.f32 %v726, %v722
        %v729 = vmul.f32 %v726, %v723
        %v730 = vadd.f32 %v666, %v728
        %v731 = vadd.f32 %v667, %v729
        %732 = vset.pattern.permute.xlu0 16
        %733 = vperm.xlu0 %732, %v496
        %v734 = vpop.permute.xlu0 %733
        %v736 = vmul.f32 %v734, %v714
        %v737 = vmul.f32 %v734, %v715
        %v738 = vadd.f32 %v682, %v736
        %v739 = vadd.f32 %v683, %v737
        %740 = vrot.lane.b32.xlu0 %v714, 127
        %v741 = vpop.permute.xlu0 %740
        %742 = vrot.lane.b32.xlu0 %v715, 127
        %v743 = vpop.permute.xlu0 %742
        %v744 = vsel %vm518, %v741, %v743
        %v745 = vsel %vm518, %v743, %v741
        %v746 = vsel %vm347, %v744, 0.0
        %v747 = vsel %vm348, %v745, 0.0
        %748 = vset.pattern.permute.xlu0 17
        %749 = vperm.xlu0 %748, %v496
        %v750 = vpop.permute.xlu0 %749
        %v752 = vmul.f32 %v750, %v746
        %v753 = vmul.f32 %v750, %v747
        %v754 = vadd.f32 %v690, %v752
        %v755 = vadd.f32 %v691, %v753
        %v756 = vsel %vm339, %v474, 0.0
        %v757 = vsel %vm340, %v475, 0.0
        %758 = vrot.lane.b32.xlu0 %v756, 8
        %v759 = vpop.permute.xlu0 %758
        %760 = vrot.lane.b32.xlu0 %v757, 8
        %v761 = vpop.permute.xlu0 %760
        %v762 = vsel %vm482, %v759, %v761
        %v763 = vsel %vm482, %v761, %v759
        %v764 = vsel %vm341, %v763, 0.0
        %v765 = vsel %vm342, %v762, 0.0
        %766 = vrot.lane.b32.xlu0 %v764, 1
        %v767 = vpop.permute.xlu0 %766
        %768 = vrot.lane.b32.xlu0 %v765, 1
        %v769 = vpop.permute.xlu0 %768
        %v770 = vsel %vm491, %v767, %v769
        %v771 = vsel %vm491, %v769, %v767
        %v772 = vsel %vm345, %v771, 0.0
        %v773 = vsel %vm346, %v770, 0.0
        %774 = vset.pattern.permute.xlu0 18
        %775 = vperm.xlu0 %774, %v496
        %v776 = vpop.permute.xlu0 %775
        %v778 = vmul.f32 %v776, %v772
        %v779 = vmul.f32 %v776, %v773
        %v780 = vadd.f32 %v706, %v778
        %v781 = vadd.f32 %v707, %v779
        %782 = vset.pattern.permute.xlu0 19
        %783 = vperm.xlu0 %782, %v496
        %v784 = vpop.permute.xlu0 %783
        %v786 = vmul.f32 %v784, %v764
        %v787 = vmul.f32 %v784, %v765
        %v788 = vadd.f32 %v730, %v786
        %v789 = vadd.f32 %v731, %v787
        %790 = vrot.lane.b32.xlu0 %v764, 127
        %v791 = vpop.permute.xlu0 %790
        %792 = vrot.lane.b32.xlu0 %v765, 127
        %v793 = vpop.permute.xlu0 %792
        %v794 = vsel %vm518, %v791, %v793
        %v795 = vsel %vm518, %v793, %v791
        %v796 = vsel %vm347, %v794, 0.0
        %v797 = vsel %vm348, %v795, 0.0
        %798 = vset.pattern.permute.xlu0 20
        %799 = vperm.xlu0 %798, %v496
        %v800 = vpop.permute.xlu0 %799
        %v802 = vmul.f32 %v800, %v796
        %v803 = vmul.f32 %v800, %v797
        %v804 = vadd.f32 %v738, %v802
        %v805 = vadd.f32 %v739, %v803
        %806 = vrot.lane.b32.xlu0 %v756, 1
        %v807 = vpop.permute.xlu0 %806
        %808 = vrot.lane.b32.xlu0 %v757, 1
        %v809 = vpop.permute.xlu0 %808
        %v810 = vsel %vm491, %v807, %v809
        %v811 = vsel %vm491, %v809, %v807
        %v812 = vsel %vm345, %v811, 0.0
        %v813 = vsel %vm346, %v810, 0.0
        %814 = vset.pattern.permute.xlu0 21
        %815 = vperm.xlu0 %814, %v496
        %v816 = vpop.permute.xlu0 %815
        %v818 = vmul.f32 %v816, %v812
        %v819 = vmul.f32 %v816, %v813
        %v820 = vadd.f32 %v754, %v818
        %v821 = vadd.f32 %v755, %v819
        %822 = vset.pattern.permute.xlu0 22
        %823 = vperm.xlu0 %822, %v496
        %v824 = vpop.permute.xlu0 %823
        %v826 = vmul.f32 %v824, %v756
        %v827 = vmul.f32 %v824, %v757
        %v828 = vadd.f32 %v780, %v826
        %v829 = vadd.f32 %v781, %v827
        %830 = vrot.lane.b32.xlu0 %v756, 127
        %v831 = vpop.permute.xlu0 %830
        %832 = vrot.lane.b32.xlu0 %v757, 127
        %v833 = vpop.permute.xlu0 %832
        %v834 = vsel %vm518, %v831, %v833
        %v835 = vsel %vm518, %v833, %v831
        %v836 = vsel %vm347, %v834, 0.0
        %v837 = vsel %vm348, %v835, 0.0
        %838 = vset.pattern.permute.xlu0 23
        %839 = vperm.xlu0 %838, %v496
        %v840 = vpop.permute.xlu0 %839
        %v842 = vmul.f32 %v840, %v836
        %v843 = vmul.f32 %v840, %v837
        %v844 = vadd.f32 %v788, %v842
        %v845 = vadd.f32 %v789, %v843
        %846 = vrot.lane.b32.xlu0 %v756, 120
        %v847 = vpop.permute.xlu0 %846
        %848 = vrot.lane.b32.xlu0 %v757, 120
        %v849 = vpop.permute.xlu0 %848
        %v850 = vsel %vm575, %v847, %v849
        %v851 = vsel %vm575, %v849, %v847
        %v852 = vsel %vm343, %v850, 0.0
        %v853 = vsel %vm344, %v851, 0.0
        %854 = vrot.lane.b32.xlu0 %v852, 1
        %v855 = vpop.permute.xlu0 %854
        %856 = vrot.lane.b32.xlu0 %v853, 1
        %v857 = vpop.permute.xlu0 %856
        %v858 = vsel %vm491, %v855, %v857
        %v859 = vsel %vm491, %v857, %v855
        %v860 = vsel %vm345, %v859, 0.0
        %v861 = vsel %vm346, %v858, 0.0
        %862 = vset.pattern.permute.xlu0 24
        %863 = vperm.xlu0 %862, %v496
        %v864 = vpop.permute.xlu0 %863
        %v866 = vmul.f32 %v864, %v860
        %v867 = vmul.f32 %v864, %v861
        %v868 = vadd.f32 %v804, %v866
        %v869 = vadd.f32 %v805, %v867
        %870 = vset.pattern.permute.xlu0 25
        %871 = vperm.xlu0 %870, %v496
        %v872 = vpop.permute.xlu0 %871
        %v874 = vmul.f32 %v872, %v852
        %v875 = vmul.f32 %v872, %v853
        %v876 = vadd.f32 %v820, %v874
        %v877 = vadd.f32 %v821, %v875
        %878 = vrot.lane.b32.xlu0 %v852, 127
        %v879 = vpop.permute.xlu0 %878
        %880 = vrot.lane.b32.xlu0 %v853, 127
        %v881 = vpop.permute.xlu0 %880
        %v882 = vsel %vm518, %v879, %v881
        %v883 = vsel %vm518, %v881, %v879
        %v884 = vsel %vm347, %v882, 0.0
        %v885 = vsel %vm348, %v883, 0.0
        %886 = vset.pattern.permute.xlu0 26
        %887 = vperm.xlu0 %886, %v496
        %v888 = vpop.permute.xlu0 %887
        %v890 = vmul.f32 %v888, %v884
        %v891 = vmul.f32 %v888, %v885
        %v892 = vadd.f32 %v828, %v890
        %v893 = vadd.f32 %v829, %v891
        %v894 = vadd.f32 %v868, %v876
        %v895 = vadd.f32 %v869, %v877
        %v896 = vadd.f32 %v892, %v844
        %v897 = vadd.f32 %v893, %v845
        %v898 = vadd.f32 %v894, %v896
        %v899 = vadd.f32 %v895, %v897
        %vm900 = vcmask 1041408
        %v901 = vsel %vm900, %v898, 0.0
        %v902 = vrot.slane %v901, 4
        %v903 = vadd.f32 %v901, %v902
        %v904 = vrot.slane %v903, 2
        %v905 = vadd.f32 %v903, %v904
        %v906 = vrot.slane %v905, 1
        %v907 = vadd.f32 %v905, %v906
        %v908 = vsel %vm900, %v899, 0.0
        %v909 = vrot.slane %v908, 4
        %v910 = vadd.f32 %v908, %v909
        %v911 = vrot.slane %v910, 2
        %v912 = vadd.f32 %v910, %v911
        %v913 = vrot.slane %v912, 1
        %v914 = vadd.f32 %v912, %v913
        %v917 = vcombine.low %v907, %v914
        %v919 = vunpack.c.l.s4 1966171168
        %v920 = vunpack.c.0.s8 %v919
        %v921 = vlaneseq
        %v922 = vshrl.u32 %v921, 7
        %v923 = vsub.s32 %v920, %v922
        %v924 = vrot.slane %v917, %v923
        %v926 = vunpack.c.l.s4 1966171168
        %v927 = vunpack.c.0.s8 %v926
        %v928 = vlaneseq
        %v929 = vshrl.u32 %v928, 7
        %v930 = vsub.s32 %v927, %v929
        %v931 = vrot.slane %v924, %v930
        %v933 = vlaneseq
        %vm934 = vcmp.ge.s32.totalorder %v933, 0
        %vm935 = vcmp.lt.s32.totalorder %v933, 256
        %vm936 = vmand %vm934, %vm935
        %937 = vst.msk [vmem:[%s315] sm:$0x3] %vm936, %v931
        %v938 = vxor.u32 %v907, 2147483648
        %v939 = vxor.u32 %v914, 2147483648
        %v940 = vmul.f32 %v938, 1.442695
        %v941 = vpow.pop %v940
        %v942 = vmul.f32 %v939, 1.442695
        %v943 = vpow.pop %v942
        %v944 = vadd.f32 %v941, 1.0
        %v945 = vadd.f32 %v943, 1.0
        %v946 = vrcp.pop %v944
        %v947 = vmul.f32 1.0, %v946
        %v948 = vrcp.pop %v945
        %v949 = vmul.f32 1.0, %v948
        %v950 = vld [vmem:[%s322] sm:$0xff]
        %v951 = vld [vmem:[%s322 + $0x8] sm:$0xff]
        %v952 = vmul.f32 %v950, %v947
        %v953 = vmul.f32 %v951, %v949
        %954 = vst [vmem:[%s322] sm:$0xff] %v952
        %955 = vst [vmem:[%s322 + $0x8] sm:$0xff] %v953
        %s956 = scalar_lea.vmem %s282, 16 [#allocation2]
        %v957 = vld [vmem:[%s956] sm:$0xff]
        %v958 = vld [vmem:[%s956 + $0x8] sm:$0xff]
        %v959 = vadd.f32 %v957, %v958
        %960 = vadd.xlane.f32.xlu0 %v959
        %v961 = vpop.xlane.xlu0 %960
        %v962 = vmul.f32 %v961, %v354
        %v963 = vmax.f32 %v957, %v958
        %964 = vmax.xlane.f32.xlu0 %v963
        %v965 = vpop.xlane.xlu0 %964
        %v966 = vsel %vm359, %v962, %v965
        %v967 = vld [vmem:[%s1] sm:$0xff]
        %969 = vset.pattern.permute.xlu0 0
        %970 = vperm.xlu0 %969, %v967
        %v971 = vpop.permute.xlu0 %970
        %v973 = vmul.f32 %v971, %v966
        %v974 = vsel %vm368, %v973, 0.0
        %v975 = vrot.slane %v974, 4
        %v976 = vadd.f32 %v974, %v975
        %v977 = vrot.slane %v976, 2
        %v978 = vadd.f32 %v976, %v977
        %v979 = vrot.slane %v978, 1
        %v980 = vadd.f32 %v978, %v979
        %s981 = sld [smem:[#allocation6]]
        %v982 = vstv %s981
        %v983 = vadd.f32 %v980, %v982
        %v984 = vmax.f32 %v983, 0.0
        %v985 = vld [vmem:[%s380] sm:$0xff]
        %987 = vset.pattern.permute.xlu0 0
        %988 = vperm.xlu0 %987, %v985
        %v989 = vpop.permute.xlu0 %988
        %v991 = vmul.f32 %v989, %v966
        %v992 = vsel %vm368, %v991, 0.0
        %v993 = vrot.slane %v992, 4
        %v994 = vadd.f32 %v992, %v993
        %v995 = vrot.slane %v994, 2
        %v996 = vadd.f32 %v994, %v995
        %v997 = vrot.slane %v996, 1
        %v998 = vadd.f32 %v996, %v997
        %s999 = sld [smem:[#allocation6 + $0x1]]
        %v1000 = vstv %s999
        %v1001 = vadd.f32 %v998, %v1000
        %v1002 = vmax.f32 %v1001, 0.0
        %v1003 = vld [vmem:[%s3] sm:$0xff]
        %1005 = vset.pattern.permute.xlu0 0
        %1006 = vperm.xlu0 %1005, %v1003
        %v1007 = vpop.permute.xlu0 %1006
        %v1009 = vmul.f32 %v1007, %v984
        %1010 = vset.pattern.permute.xlu0 1
        %1011 = vperm.xlu0 %1010, %v1003
        %v1012 = vpop.permute.xlu0 %1011
        %v1014 = vmul.f32 %v1012, %v1002
        %v1015 = vadd.f32 %v1009, %v1014
        %v1016 = vld [vmem:[%s4] sm:$0xff]
        %1018 = vset.pattern.permute.xlu0 0
        %1019 = vperm.xlu0 %1018, %v1016
        %v1020 = vpop.permute.xlu0 %1019
        %v1022 = vadd.f32 %v1015, %v1020
        %1024 = vrot.lane.b32.xlu0 %v1022, 127
        %v1025 = vpop.permute.xlu0 %1024
        %v1027 = vadd.f32 %v1022, %v1025
        %v1028 = vxor.u32 %v1027, 2147483648
        %v1029 = vmul.f32 %v1028, 1.442695
        %v1030 = vpow.pop %v1029
        %v1031 = vadd.f32 %v1030, 1.0
        %v1032 = vrcp.pop %v1031
        %v1033 = vmul.f32 1.0, %v1032
        %1035 = vset.pattern.permute.xlu0 0
        %1036 = vperm.xlu0 %1035, %v1033
        %v1037 = vpop.permute.xlu0 %1036
        %v1039 = vmul.f32 %v957, %v1037
        %v1040 = vmul.f32 %v958, %v1037
        %v1041 = vrot.slane %v1039, 4
        %v1042 = vadd.f32 %v1039, %v1041
        %v1043 = vrot.slane %v1042, 2
        %v1044 = vadd.f32 %v1042, %v1043
        %v1045 = vrot.slane %v1044, 1
        %v1046 = vadd.f32 %v1044, %v1045
        %v1047 = vrot.slane %v1040, 4
        %v1048 = vadd.f32 %v1040, %v1047
        %v1049 = vrot.slane %v1048, 2
        %v1050 = vadd.f32 %v1048, %v1049
        %v1051 = vrot.slane %v1050, 1
        %v1052 = vadd.f32 %v1050, %v1051
        %v1053 = vmul.f32 %v1046, %v449
        %v1054 = vmul.f32 %v1052, %v449
        %v1055 = vrot.slane %v1039, 4
        %v1056 = vmax.f32 %v1039, %v1055
        %v1057 = vrot.slane %v1056, 2
        %v1058 = vmax.f32 %v1056, %v1057
        %v1059 = vrot.slane %v1058, 1
        %v1060 = vmax.f32 %v1058, %v1059
        %v1061 = vrot.slane %v1040, 4
        %v1062 = vmax.f32 %v1040, %v1061
        %v1063 = vrot.slane %v1062, 2
        %v1064 = vmax.f32 %v1062, %v1063
        %v1065 = vrot.slane %v1064, 1
        %v1066 = vmax.f32 %v1064, %v1065
        %v1067 = vsel %vm464, %v1053, %v1060
        %v1068 = vsel %vm464, %v1054, %v1066
        %s1069 = scalar_lea.vmem %s322, 16 [#allocation8]
        %1070 = vst [vmem:[%s1069] sm:$0xff] %v1039
        %1071 = vst [vmem:[%s1069 + $0x8] sm:$0xff] %v1040
        %1072 = vrot.lane.b32.xlu0 %v1067, 64
        %v1073 = vpop.permute.xlu0 %1072
        %1074 = vrot.lane.b32.xlu0 %v1068, 64
        %v1075 = vpop.permute.xlu0 %1074
        %v1076 = vsel %vm473, %v1073, %v1075
        %v1077 = vsel %vm473, %v1075, %v1073
        %v1078 = vsel %vm337, %v1077, 0.0
        %v1079 = vsel %vm338, %v1076, 0.0
        %1080 = vrot.lane.b32.xlu0 %v1078, 8
        %v1081 = vpop.permute.xlu0 %1080
        %1082 = vrot.lane.b32.xlu0 %v1079, 8
        %v1083 = vpop.permute.xlu0 %1082
        %v1084 = vsel %vm482, %v1081, %v1083
        %v1085 = vsel %vm482, %v1083, %v1081
        %v1086 = vsel %vm341, %v1085, 0.0
        %v1087 = vsel %vm342, %v1084, 0.0
        %1088 = vrot.lane.b32.xlu0 %v1086, 1
        %v1089 = vpop.permute.xlu0 %1088
        %1090 = vrot.lane.b32.xlu0 %v1087, 1
        %v1091 = vpop.permute.xlu0 %1090
        %v1092 = vsel %vm491, %v1089, %v1091
        %v1093 = vsel %vm491, %v1091, %v1089
        %v1094 = vsel %vm345, %v1093, 0.0
        %v1095 = vsel %vm346, %v1092, 0.0
        %v1096 = vld [vmem:[%s5] sm:$0x3]
        %1098 = vset.pattern.permute.xlu0 0
        %1099 = vperm.xlu0 %1098, %v1096
        %v1100 = vpop.permute.xlu0 %1099
        %v1102 = vmul.f32 %v1100, %v1094
        %v1103 = vmul.f32 %v1100, %v1095
        %v1104 = vadd.f32 %v1102, 0.0
        %v1105 = vadd.f32 %v1103, 0.0
        %1106 = vset.pattern.permute.xlu0 1
        %1107 = vperm.xlu0 %1106, %v1096
        %v1108 = vpop.permute.xlu0 %1107
        %v1110 = vmul.f32 %v1108, %v1086
        %v1111 = vmul.f32 %v1108, %v1087
        %v1112 = vadd.f32 %v1110, 0.0
        %v1113 = vadd.f32 %v1111, 0.0
        %1114 = vrot.lane.b32.xlu0 %v1086, 127
        %v1115 = vpop.permute.xlu0 %1114
        %1116 = vrot.lane.b32.xlu0 %v1087, 127
        %v1117 = vpop.permute.xlu0 %1116
        %v1118 = vsel %vm518, %v1115, %v1117
        %v1119 = vsel %vm518, %v1117, %v1115
        %v1120 = vsel %vm347, %v1118, 0.0
        %v1121 = vsel %vm348, %v1119, 0.0
        %1122 = vset.pattern.permute.xlu0 2
        %1123 = vperm.xlu0 %1122, %v1096
        %v1124 = vpop.permute.xlu0 %1123
        %v1126 = vmul.f32 %v1124, %v1120
        %v1127 = vmul.f32 %v1124, %v1121
        %v1128 = vadd.f32 %v1126, 0.0
        %v1129 = vadd.f32 %v1127, 0.0
        %1130 = vrot.lane.b32.xlu0 %v1078, 1
        %v1131 = vpop.permute.xlu0 %1130
        %1132 = vrot.lane.b32.xlu0 %v1079, 1
        %v1133 = vpop.permute.xlu0 %1132
        %v1134 = vsel %vm491, %v1131, %v1133
        %v1135 = vsel %vm491, %v1133, %v1131
        %v1136 = vsel %vm345, %v1135, 0.0
        %v1137 = vsel %vm346, %v1134, 0.0
        %1138 = vset.pattern.permute.xlu0 3
        %1139 = vperm.xlu0 %1138, %v1096
        %v1140 = vpop.permute.xlu0 %1139
        %v1142 = vmul.f32 %v1140, %v1136
        %v1143 = vmul.f32 %v1140, %v1137
        %v1144 = vadd.f32 %v1142, 0.0
        %v1145 = vadd.f32 %v1143, 0.0
        %1146 = vset.pattern.permute.xlu0 4
        %1147 = vperm.xlu0 %1146, %v1096
        %v1148 = vpop.permute.xlu0 %1147
        %v1150 = vmul.f32 %v1148, %v1078
        %v1151 = vmul.f32 %v1148, %v1079
        %v1152 = vadd.f32 %v1104, %v1150
        %v1153 = vadd.f32 %v1105, %v1151
        %1154 = vrot.lane.b32.xlu0 %v1078, 127
        %v1155 = vpop.permute.xlu0 %1154
        %1156 = vrot.lane.b32.xlu0 %v1079, 127
        %v1157 = vpop.permute.xlu0 %1156
        %v1158 = vsel %vm518, %v1155, %v1157
        %v1159 = vsel %vm518, %v1157, %v1155
        %v1160 = vsel %vm347, %v1158, 0.0
        %v1161 = vsel %vm348, %v1159, 0.0
        %1162 = vset.pattern.permute.xlu0 5
        %1163 = vperm.xlu0 %1162, %v1096
        %v1164 = vpop.permute.xlu0 %1163
        %v1166 = vmul.f32 %v1164, %v1160
        %v1167 = vmul.f32 %v1164, %v1161
        %v1168 = vadd.f32 %v1112, %v1166
        %v1169 = vadd.f32 %v1113, %v1167
        %1170 = vrot.lane.b32.xlu0 %v1078, 120
        %v1171 = vpop.permute.xlu0 %1170
        %1172 = vrot.lane.b32.xlu0 %v1079, 120
        %v1173 = vpop.permute.xlu0 %1172
        %v1174 = vsel %vm575, %v1171, %v1173
        %v1175 = vsel %vm575, %v1173, %v1171
        %v1176 = vsel %vm343, %v1174, 0.0
        %v1177 = vsel %vm344, %v1175, 0.0
        %1178 = vrot.lane.b32.xlu0 %v1176, 1
        %v1179 = vpop.permute.xlu0 %1178
        %1180 = vrot.lane.b32.xlu0 %v1177, 1
        %v1181 = vpop.permute.xlu0 %1180
        %v1182 = vsel %vm491, %v1179, %v1181
        %v1183 = vsel %vm491, %v1181, %v1179
        %v1184 = vsel %vm345, %v1183, 0.0
        %v1185 = vsel %vm346, %v1182, 0.0
        %1186 = vset.pattern.permute.xlu0 6
        %1187 = vperm.xlu0 %1186, %v1096
        %v1188 = vpop.permute.xlu0 %1187
        %v1190 = vmul.f32 %v1188, %v1184
        %v1191 = vmul.f32 %v1188, %v1185
        %v1192 = vadd.f32 %v1128, %v1190
        %v1193 = vadd.f32 %v1129, %v1191
        %1194 = vset.pattern.permute.xlu0 7
        %1195 = vperm.xlu0 %1194, %v1096
        %v1196 = vpop.permute.xlu0 %1195
        %v1198 = vmul.f32 %v1196, %v1176
        %v1199 = vmul.f32 %v1196, %v1177
        %v1200 = vadd.f32 %v1144, %v1198
        %v1201 = vadd.f32 %v1145, %v1199
        %1202 = vrot.lane.b32.xlu0 %v1176, 127
        %v1203 = vpop.permute.xlu0 %1202
        %1204 = vrot.lane.b32.xlu0 %v1177, 127
        %v1205 = vpop.permute.xlu0 %1204
        %v1206 = vsel %vm518, %v1203, %v1205
        %v1207 = vsel %vm518, %v1205, %v1203
        %v1208 = vsel %vm347, %v1206, 0.0
        %v1209 = vsel %vm348, %v1207, 0.0
        %1210 = vset.pattern.permute.xlu0 8
        %1211 = vperm.xlu0 %1210, %v1096
        %v1212 = vpop.permute.xlu0 %1211
        %v1214 = vmul.f32 %v1212, %v1208
        %v1215 = vmul.f32 %v1212, %v1209
        %v1216 = vadd.f32 %v1152, %v1214
        %v1217 = vadd.f32 %v1153, %v1215
        %1218 = vrot.lane.b32.xlu0 %v1067, 8
        %v1219 = vpop.permute.xlu0 %1218
        %1220 = vrot.lane.b32.xlu0 %v1068, 8
        %v1221 = vpop.permute.xlu0 %1220
        %v1222 = vsel %vm482, %v1219, %v1221
        %v1223 = vsel %vm482, %v1221, %v1219
        %v1224 = vsel %vm341, %v1223, 0.0
        %v1225 = vsel %vm342, %v1222, 0.0
        %1226 = vrot.lane.b32.xlu0 %v1224, 1
        %v1227 = vpop.permute.xlu0 %1226
        %1228 = vrot.lane.b32.xlu0 %v1225, 1
        %v1229 = vpop.permute.xlu0 %1228
        %v1230 = vsel %vm491, %v1227, %v1229
        %v1231 = vsel %vm491, %v1229, %v1227
        %v1232 = vsel %vm345, %v1231, 0.0
        %v1233 = vsel %vm346, %v1230, 0.0
        %1234 = vset.pattern.permute.xlu0 9
        %1235 = vperm.xlu0 %1234, %v1096
        %v1236 = vpop.permute.xlu0 %1235
        %v1238 = vmul.f32 %v1236, %v1232
        %v1239 = vmul.f32 %v1236, %v1233
        %v1240 = vadd.f32 %v1168, %v1238
        %v1241 = vadd.f32 %v1169, %v1239
        %1242 = vset.pattern.permute.xlu0 10
        %1243 = vperm.xlu0 %1242, %v1096
        %v1244 = vpop.permute.xlu0 %1243
        %v1246 = vmul.f32 %v1244, %v1224
        %v1247 = vmul.f32 %v1244, %v1225
        %v1248 = vadd.f32 %v1192, %v1246
        %v1249 = vadd.f32 %v1193, %v1247
        %1250 = vrot.lane.b32.xlu0 %v1224, 127
        %v1251 = vpop.permute.xlu0 %1250
        %1252 = vrot.lane.b32.xlu0 %v1225, 127
        %v1253 = vpop.permute.xlu0 %1252
        %v1254 = vsel %vm518, %v1251, %v1253
        %v1255 = vsel %vm518, %v1253, %v1251
        %v1256 = vsel %vm347, %v1254, 0.0
        %v1257 = vsel %vm348, %v1255, 0.0
        %1258 = vset.pattern.permute.xlu0 11
        %1259 = vperm.xlu0 %1258, %v1096
        %v1260 = vpop.permute.xlu0 %1259
        %v1262 = vmul.f32 %v1260, %v1256
        %v1263 = vmul.f32 %v1260, %v1257
        %v1264 = vadd.f32 %v1200, %v1262
        %v1265 = vadd.f32 %v1201, %v1263
        %1266 = vrot.lane.b32.xlu0 %v1067, 1
        %v1267 = vpop.permute.xlu0 %1266
        %1268 = vrot.lane.b32.xlu0 %v1068, 1
        %v1269 = vpop.permute.xlu0 %1268
        %v1270 = vsel %vm491, %v1267, %v1269
        %v1271 = vsel %vm491, %v1269, %v1267
        %v1272 = vsel %vm345, %v1271, 0.0
        %v1273 = vsel %vm346, %v1270, 0.0
        %1274 = vset.pattern.permute.xlu0 12
        %1275 = vperm.xlu0 %1274, %v1096
        %v1276 = vpop.permute.xlu0 %1275
        %v1278 = vmul.f32 %v1276, %v1272
        %v1279 = vmul.f32 %v1276, %v1273
        %v1280 = vadd.f32 %v1216, %v1278
        %v1281 = vadd.f32 %v1217, %v1279
        %1282 = vset.pattern.permute.xlu0 13
        %1283 = vperm.xlu0 %1282, %v1096
        %v1284 = vpop.permute.xlu0 %1283
        %v1286 = vmul.f32 %v1284, %v1067
        %v1287 = vmul.f32 %v1284, %v1068
        %v1288 = vadd.f32 %v1240, %v1286
        %v1289 = vadd.f32 %v1241, %v1287
        %1290 = vrot.lane.b32.xlu0 %v1067, 127
        %v1291 = vpop.permute.xlu0 %1290
        %1292 = vrot.lane.b32.xlu0 %v1068, 127
        %v1293 = vpop.permute.xlu0 %1292
        %v1294 = vsel %vm518, %v1291, %v1293
        %v1295 = vsel %vm518, %v1293, %v1291
        %v1296 = vsel %vm347, %v1294, 0.0
        %v1297 = vsel %vm348, %v1295, 0.0
        %1298 = vset.pattern.permute.xlu0 14
        %1299 = vperm.xlu0 %1298, %v1096
        %v1300 = vpop.permute.xlu0 %1299
        %v1302 = vmul.f32 %v1300, %v1296
        %v1303 = vmul.f32 %v1300, %v1297
        %v1304 = vadd.f32 %v1248, %v1302
        %v1305 = vadd.f32 %v1249, %v1303
        %1306 = vrot.lane.b32.xlu0 %v1067, 120
        %v1307 = vpop.permute.xlu0 %1306
        %1308 = vrot.lane.b32.xlu0 %v1068, 120
        %v1309 = vpop.permute.xlu0 %1308
        %v1310 = vsel %vm575, %v1307, %v1309
        %v1311 = vsel %vm575, %v1309, %v1307
        %v1312 = vsel %vm343, %v1310, 0.0
        %v1313 = vsel %vm344, %v1311, 0.0
        %1314 = vrot.lane.b32.xlu0 %v1312, 1
        %v1315 = vpop.permute.xlu0 %1314
        %1316 = vrot.lane.b32.xlu0 %v1313, 1
        %v1317 = vpop.permute.xlu0 %1316
        %v1318 = vsel %vm491, %v1315, %v1317
        %v1319 = vsel %vm491, %v1317, %v1315
        %v1320 = vsel %vm345, %v1319, 0.0
        %v1321 = vsel %vm346, %v1318, 0.0
        %1322 = vset.pattern.permute.xlu0 15
        %1323 = vperm.xlu0 %1322, %v1096
        %v1324 = vpop.permute.xlu0 %1323
        %v1326 = vmul.f32 %v1324, %v1320
        %v1327 = vmul.f32 %v1324, %v1321
        %v1328 = vadd.f32 %v1264, %v1326
        %v1329 = vadd.f32 %v1265, %v1327
        %1330 = vset.pattern.permute.xlu0 16
        %1331 = vperm.xlu0 %1330, %v1096
        %v1332 = vpop.permute.xlu0 %1331
        %v1334 = vmul.f32 %v1332, %v1312
        %v1335 = vmul.f32 %v1332, %v1313
        %v1336 = vadd.f32 %v1280, %v1334
        %v1337 = vadd.f32 %v1281, %v1335
        %1338 = vrot.lane.b32.xlu0 %v1312, 127
        %v1339 = vpop.permute.xlu0 %1338
        %1340 = vrot.lane.b32.xlu0 %v1313, 127
        %v1341 = vpop.permute.xlu0 %1340
        %v1342 = vsel %vm518, %v1339, %v1341
        %v1343 = vsel %vm518, %v1341, %v1339
        %v1344 = vsel %vm347, %v1342, 0.0
        %v1345 = vsel %vm348, %v1343, 0.0
        %1346 = vset.pattern.permute.xlu0 17
        %1347 = vperm.xlu0 %1346, %v1096
        %v1348 = vpop.permute.xlu0 %1347
        %v1350 = vmul.f32 %v1348, %v1344
        %v1351 = vmul.f32 %v1348, %v1345
        %v1352 = vadd.f32 %v1288, %v1350
        %v1353 = vadd.f32 %v1289, %v1351
        %v1354 = vsel %vm339, %v1076, 0.0
        %v1355 = vsel %vm340, %v1077, 0.0
        %1356 = vrot.lane.b32.xlu0 %v1354, 8
        %v1357 = vpop.permute.xlu0 %1356
        %1358 = vrot.lane.b32.xlu0 %v1355, 8
        %v1359 = vpop.permute.xlu0 %1358
        %v1360 = vsel %vm482, %v1357, %v1359
        %v1361 = vsel %vm482, %v1359, %v1357
        %v1362 = vsel %vm341, %v1361, 0.0
        %v1363 = vsel %vm342, %v1360, 0.0
        %1364 = vrot.lane.b32.xlu0 %v1362, 1
        %v1365 = vpop.permute.xlu0 %1364
        %1366 = vrot.lane.b32.xlu0 %v1363, 1
        %v1367 = vpop.permute.xlu0 %1366
        %v1368 = vsel %vm491, %v1365, %v1367
        %v1369 = vsel %vm491, %v1367, %v1365
        %v1370 = vsel %vm345, %v1369, 0.0
        %v1371 = vsel %vm346, %v1368, 0.0
        %1372 = vset.pattern.permute.xlu0 18
        %1373 = vperm.xlu0 %1372, %v1096
        %v1374 = vpop.permute.xlu0 %1373
        %v1376 = vmul.f32 %v1374, %v1370
        %v1377 = vmul.f32 %v1374, %v1371
        %v1378 = vadd.f32 %v1304, %v1376
        %v1379 = vadd.f32 %v1305, %v1377
        %1380 = vset.pattern.permute.xlu0 19
        %1381 = vperm.xlu0 %1380, %v1096
        %v1382 = vpop.permute.xlu0 %1381
        %v1384 = vmul.f32 %v1382, %v1362
        %v1385 = vmul.f32 %v1382, %v1363
        %v1386 = vadd.f32 %v1328, %v1384
        %v1387 = vadd.f32 %v1329, %v1385
        %1388 = vrot.lane.b32.xlu0 %v1362, 127
        %v1389 = vpop.permute.xlu0 %1388
        %1390 = vrot.lane.b32.xlu0 %v1363, 127
        %v1391 = vpop.permute.xlu0 %1390
        %v1392 = vsel %vm518, %v1389, %v1391
        %v1393 = vsel %vm518, %v1391, %v1389
        %v1394 = vsel %vm347, %v1392, 0.0
        %v1395 = vsel %vm348, %v1393, 0.0
        %1396 = vset.pattern.permute.xlu0 20
        %1397 = vperm.xlu0 %1396, %v1096
        %v1398 = vpop.permute.xlu0 %1397
        %v1400 = vmul.f32 %v1398, %v1394
        %v1401 = vmul.f32 %v1398, %v1395
        %v1402 = vadd.f32 %v1336, %v1400
        %v1403 = vadd.f32 %v1337, %v1401
        %1404 = vrot.lane.b32.xlu0 %v1354, 1
        %v1405 = vpop.permute.xlu0 %1404
        %1406 = vrot.lane.b32.xlu0 %v1355, 1
        %v1407 = vpop.permute.xlu0 %1406
        %v1408 = vsel %vm491, %v1405, %v1407
        %v1409 = vsel %vm491, %v1407, %v1405
        %v1410 = vsel %vm345, %v1409, 0.0
        %v1411 = vsel %vm346, %v1408, 0.0
        %1412 = vset.pattern.permute.xlu0 21
        %1413 = vperm.xlu0 %1412, %v1096
        %v1414 = vpop.permute.xlu0 %1413
        %v1416 = vmul.f32 %v1414, %v1410
        %v1417 = vmul.f32 %v1414, %v1411
        %v1418 = vadd.f32 %v1352, %v1416
        %v1419 = vadd.f32 %v1353, %v1417
        %1420 = vset.pattern.permute.xlu0 22
        %1421 = vperm.xlu0 %1420, %v1096
        %v1422 = vpop.permute.xlu0 %1421
        %v1424 = vmul.f32 %v1422, %v1354
        %v1425 = vmul.f32 %v1422, %v1355
        %v1426 = vadd.f32 %v1378, %v1424
        %v1427 = vadd.f32 %v1379, %v1425
        %1428 = vrot.lane.b32.xlu0 %v1354, 127
        %v1429 = vpop.permute.xlu0 %1428
        %1430 = vrot.lane.b32.xlu0 %v1355, 127
        %v1431 = vpop.permute.xlu0 %1430
        %v1432 = vsel %vm518, %v1429, %v1431
        %v1433 = vsel %vm518, %v1431, %v1429
        %v1434 = vsel %vm347, %v1432, 0.0
        %v1435 = vsel %vm348, %v1433, 0.0
        %1436 = vset.pattern.permute.xlu0 23
        %1437 = vperm.xlu0 %1436, %v1096
        %v1438 = vpop.permute.xlu0 %1437
        %v1440 = vmul.f32 %v1438, %v1434
        %v1441 = vmul.f32 %v1438, %v1435
        %v1442 = vadd.f32 %v1386, %v1440
        %v1443 = vadd.f32 %v1387, %v1441
        %1444 = vrot.lane.b32.xlu0 %v1354, 120
        %v1445 = vpop.permute.xlu0 %1444
        %1446 = vrot.lane.b32.xlu0 %v1355, 120
        %v1447 = vpop.permute.xlu0 %1446
        %v1448 = vsel %vm575, %v1445, %v1447
        %v1449 = vsel %vm575, %v1447, %v1445
        %v1450 = vsel %vm343, %v1448, 0.0
        %v1451 = vsel %vm344, %v1449, 0.0
        %1452 = vrot.lane.b32.xlu0 %v1450, 1
        %v1453 = vpop.permute.xlu0 %1452
        %1454 = vrot.lane.b32.xlu0 %v1451, 1
        %v1455 = vpop.permute.xlu0 %1454
        %v1456 = vsel %vm491, %v1453, %v1455
        %v1457 = vsel %vm491, %v1455, %v1453
        %v1458 = vsel %vm345, %v1457, 0.0
        %v1459 = vsel %vm346, %v1456, 0.0
        %1460 = vset.pattern.permute.xlu0 24
        %1461 = vperm.xlu0 %1460, %v1096
        %v1462 = vpop.permute.xlu0 %1461
        %v1464 = vmul.f32 %v1462, %v1458
        %v1465 = vmul.f32 %v1462, %v1459
        %v1466 = vadd.f32 %v1402, %v1464
        %v1467 = vadd.f32 %v1403, %v1465
        %1468 = vset.pattern.permute.xlu0 25
        %1469 = vperm.xlu0 %1468, %v1096
        %v1470 = vpop.permute.xlu0 %1469
        %v1472 = vmul.f32 %v1470, %v1450
        %v1473 = vmul.f32 %v1470, %v1451
        %v1474 = vadd.f32 %v1418, %v1472
        %v1475 = vadd.f32 %v1419, %v1473
        %1476 = vrot.lane.b32.xlu0 %v1450, 127
        %v1477 = vpop.permute.xlu0 %1476
        %1478 = vrot.lane.b32.xlu0 %v1451, 127
        %v1479 = vpop.permute.xlu0 %1478
        %v1480 = vsel %vm518, %v1477, %v1479
        %v1481 = vsel %vm518, %v1479, %v1477
        %v1482 = vsel %vm347, %v1480, 0.0
        %v1483 = vsel %vm348, %v1481, 0.0
        %1484 = vset.pattern.permute.xlu0 26
        %1485 = vperm.xlu0 %1484, %v1096
        %v1486 = vpop.permute.xlu0 %1485
        %v1488 = vmul.f32 %v1486, %v1482
        %v1489 = vmul.f32 %v1486, %v1483
        %v1490 = vadd.f32 %v1426, %v1488
        %v1491 = vadd.f32 %v1427, %v1489
        %v1492 = vadd.f32 %v1466, %v1474
        %v1493 = vadd.f32 %v1467, %v1475
        %v1494 = vadd.f32 %v1490, %v1442
        %v1495 = vadd.f32 %v1491, %v1443
        %v1496 = vadd.f32 %v1492, %v1494
        %v1497 = vadd.f32 %v1493, %v1495
        %v1498 = vsel %vm900, %v1496, 0.0
        %v1499 = vrot.slane %v1498, 4
        %v1500 = vadd.f32 %v1498, %v1499
        %v1501 = vrot.slane %v1500, 2
        %v1502 = vadd.f32 %v1500, %v1501
        %v1503 = vrot.slane %v1502, 1
        %v1504 = vadd.f32 %v1502, %v1503
        %v1505 = vsel %vm900, %v1497, 0.0
        %v1506 = vrot.slane %v1505, 4
        %v1507 = vadd.f32 %v1505, %v1506
        %v1508 = vrot.slane %v1507, 2
        %v1509 = vadd.f32 %v1507, %v1508
        %v1510 = vrot.slane %v1509, 1
        %v1511 = vadd.f32 %v1509, %v1510
        %v1514 = vcombine.low %v1504, %v1511
        %v1516 = vunpack.c.l.s4 1966171168
        %v1517 = vunpack.c.0.s8 %v1516
        %v1518 = vlaneseq
        %v1519 = vshrl.u32 %v1518, 7
        %v1520 = vsub.s32 %v1517, %v1519
        %v1521 = vrot.slane %v1514, %v1520
        %v1523 = vunpack.c.l.s4 1966171168
        %v1524 = vunpack.c.0.s8 %v1523
        %v1525 = vlaneseq
        %v1526 = vshrl.u32 %v1525, 7
        %v1527 = vsub.s32 %v1524, %v1526
        %v1528 = vrot.slane %v1521, %v1527
        %s1530 = scalar_lea.vmem %s315, 2 [#allocation7]
        %1531 = vst.msk [vmem:[%s1530] sm:$0x3] %vm936, %v1528
        %v1532 = vxor.u32 %v1504, 2147483648
        %v1533 = vxor.u32 %v1511, 2147483648
        %v1534 = vmul.f32 %v1532, 1.442695
        %v1535 = vpow.pop %v1534
        %v1536 = vmul.f32 %v1533, 1.442695
        %v1537 = vpow.pop %v1536
        %v1538 = vadd.f32 %v1535, 1.0
        %v1539 = vadd.f32 %v1537, 1.0
        %v1540 = vrcp.pop %v1538
        %v1541 = vmul.f32 1.0, %v1540
        %v1542 = vrcp.pop %v1539
        %v1543 = vmul.f32 1.0, %v1542
        %v1544 = vld [vmem:[%s1069] sm:$0xff]
        %v1545 = vld [vmem:[%s1069 + $0x8] sm:$0xff]
        %v1546 = vmul.f32 %v1544, %v1541
        %v1547 = vmul.f32 %v1545, %v1543
        %1548 = vst [vmem:[%s1069] sm:$0xff] %v1546
        %1549 = vst [vmem:[%s1069 + $0x8] sm:$0xff] %v1547
        %s1550 = sand.u32 %s168, 1
        %s1551 = scalar_lea.sflag [#allocation4], %s1550
        %s1552 = sand.u32 %s168, 1
        %s1553 = smul.addr %s1552, 4
        %s1554 = scalar_lea.vmem [#allocation7], %s1553
        %s1555 = sand.u32 %s194, 1
        %s1556 = scalar_lea.sflag [#allocation9], %s1555
        %s1557 = sand.u32 %s194, 1
        %s1558 = smul.addr %s1557, 32
        %s1559 = scalar_lea.vmem [#allocation8], %s1558
        // Predicated region
        $region53: #{tpu_custom_call.1} parent=43 // pred_check
          %p1560 = pneg %p178
        $region54: #{tpu_custom_call.1} parent=43 // pred_check_branch
          %1562 = sbr.rel (%p1560) target = $region56
        $region55: #{tpu_custom_call.1} parent=43 // pred_region
          %s1563 = smul.u32 2, %s29
          %s1565 = ssub.s32 64, 64
          %1566 = vsyncadd %s1551, %s1565
          %s1567 = smul.addr %s1563, 2
          %s1568 = smul.addr %s1567, 16
          %s1569 = scalar_lea.hbm %s6, %s1568
          %s1570 = sshll.u32 %s1554, 4
          %s1571 = int_to_ptr.vmem [resolvable:$true] %s1570
          %1576 = dma.vmem_to_hbm [thread:$0]  %s1571, 64, %s1569, %s1551, 32, 32, 2
        $region56: #{tpu_custom_call.1} parent=43 // pred_fallthru
          _
        // Predicated region
        $region57: #{tpu_custom_call.1} parent=43 // pred_check
          %p1577 = pneg %p204
        $region58: #{tpu_custom_call.1} parent=43 // pred_check_branch
          %1579 = sbr.rel (%p1577) target = $region60
        $region59: #{tpu_custom_call.1} parent=43 // pred_region
          %s1580 = smul.u32 2, %s29
          %s1582 = ssub.s32 512, 512
          %1583 = vsyncadd %s1556, %s1582
          %s1584 = smul.addr %s1580, 2
          %s1585 = smul.addr %s1584, 128
          %s1586 = scalar_lea.hbm %s7, %s1585
          %s1587 = sshll.u32 %s1559, 4
          %s1588 = int_to_ptr.vmem [resolvable:$true] %s1587
          %1593 = dma.vmem_to_hbm [thread:$0]  %s1588, 512, %s1586, %s1556, 256, 256, 16
        $region60: #{tpu_custom_call.1} parent=43 // pred_fallthru
          _
      $region44: #{tpu_custom_call.1} parent=5 // pred_fallthru
        _
      %p1594 = scmp.le.s32.totalorder 2, %s24
      // Predicated region
      $region61: #{tpu_custom_call.1} parent=5 // pred_check
        %p1595 = pneg %p1594
      $region62: #{tpu_custom_call.1} parent=5 // pred_check_branch
        %1597 = sbr.rel (%p1595) target = $region64
      $region63: #{tpu_custom_call.1} parent=5 // pred_region
        %s1598 = ssub.s32 %s24, 2
        // Predicated region
        $region65: #{tpu_custom_call.1} parent=63 // pred_check
          %p1599 = pneg %p184
        $region66: #{tpu_custom_call.1} parent=63 // pred_check_branch
          %1601 = sbr.rel (%p1599) target = $region68
        $region67: #{tpu_custom_call.1} parent=63 // pred_region
          %s1602 = sand.u32 %s169, 1
          %s1603 = scalar_lea.sflag [#allocation4], %s1602
          %s1604 = sand.u32 %s169, 1
          %s1605 = smul.addr %s1604, 4
          %s1606 = scalar_lea.vmem [#allocation7], %s1605
          %1607 = dma.done %s1603, 64
        $region68: #{tpu_custom_call.1} parent=63 // pred_fallthru
          _
        // Predicated region
        $region69: #{tpu_custom_call.1} parent=63 // pred_check
          %p1608 = pneg %p210
        $region70: #{tpu_custom_call.1} parent=63 // pred_check_branch
          %1610 = sbr.rel (%p1608) target = $region72
        $region71: #{tpu_custom_call.1} parent=63 // pred_region
          %s1611 = sand.u32 %s195, 1
          %s1612 = scalar_lea.sflag [#allocation9], %s1611
          %s1613 = sand.u32 %s195, 1
          %s1614 = smul.addr %s1613, 32
          %s1615 = scalar_lea.vmem [#allocation8], %s1614
          %1616 = dma.done %s1612, 512
        $region72: #{tpu_custom_call.1} parent=63 // pred_fallthru
          _
      $region64: #{tpu_custom_call.1} parent=5 // pred_fallthru
        _
    $region6: #{tpu_custom_call.1} parent=1 // loop_footer
      %s28 = sadd.s32 1, %s24
    $region7: #{tpu_custom_call.1} parent=1 // loop_footer_branch
      %23 = sbr.rel target = $region3
    $region8: #{tpu_custom_call.1} parent=1 // loop_exit
      _
    %1617 = vsyncpa [#allocation3], 1
    %s1618 = scalar_lea.sflag [#allocation3], 1
    %1619 = vsyncpa %s1618, 1
    %1620 = vsyncpa [#allocation4], 1
    %s1621 = scalar_lea.sflag [#allocation4], 1
    %1622 = vsyncpa %s1621, 1
    %1623 = vsyncpa [#allocation9], 1
    %s1624 = scalar_lea.sflag [#allocation9], 1
    %1625 = vsyncpa %s1624, 1
    %1626 = vsyncpa [#allocation5], 1
    %s1627 = scalar_lea.sflag [#allocation5], 1
    %1628 = vsyncpa %s1627, 1

</llo_original>
